<compile_context>
chip_gen: v5e
topology: v5e:2x2
jax: 0.10.0
libtpu: 0.0.40
codegen_flags: <defaults>
</compile_context>

<pallas_src>
import math

import jax
import jax.numpy as jnp
from jax.experimental import pallas as pl
from jax.experimental.pallas import tpu as pltpu


# ----------------------------------------------------------------------------
# Fused kernel: whole (batch-block, full network) per grid step.
# ----------------------------------------------------------------------------

def _fused_st_conv_kernel(
    x_ref,      # (BbN, Fin)        f32   module input x, batch flattened on rows
    seq_ref,    # (BbN, T)          f32   seq in NCW layout, batch flattened
    wc_ref,     # (K, BbN, BbN)     bf16  block-diag conv1 weight per tap k
    c1ss_ref,   # (2, BbN, L)       f32   folded bnc1 [scale, shift(+conv bias)]
    g1w_ref,    # (L+Fin, H)        bf16  gc1 weight (rows [:L] conv feats, [L:] x)
    att_ref,    # (2+2S, BbN, BbN)  bf16  block-diag attentions [gc1, (s_i gc1, gc2)*, gc7]
    bnss_ref,   # (2+4S, BbN, H)    f32   folded BN scale/shift stack
    gcbw_ref,   # (2S, H, H)        bf16  GC_Block gc weights
    g7w_ref,    # (H, Fin)          bf16  gc7 weight
    g7b_ref,    # (1, Fin)          f32   gc7 bias
    out_ref,    # (BbN, Fin)        f32
):
    f32, bf16 = jnp.float32, jnp.bfloat16
    K = wc_ref.shape[0]
    L = c1ss_ref.shape[2]
    S = gcbw_ref.shape[0] // 2

    x = x_ref[...]                                            # (BbN, Fin) f32
    seq = seq_ref[...].astype(bf16)                           # (BbN, T)

    # ---- conv1 (NCW, stride 1): K shifted-slice dots vs block-diag taps ----
    yc = jnp.dot(wc_ref[0], seq[:, 0:L], preferred_element_type=f32)
    for k in range(1, K):
        yc = yc + jnp.dot(wc_ref[k], seq[:, k:k + L],
                          preferred_element_type=f32)
    # folded (conv bias + eval bnc1) + tanh, all f32 elementwise
    yc = jnp.tanh(yc * c1ss_ref[0] + c1ss_ref[1])             # (BbN, L)

    # ---- gc1: cat([y_c1, x], -1) @ W, attention, folded bn1 + tanh ---------
    cat = jnp.concatenate([yc, x], axis=1).astype(bf16)       # (BbN, L+Fin)
    s = jnp.dot(cat, g1w_ref[...], preferred_element_type=f32)
    y = jnp.dot(att_ref[0], s.astype(bf16), preferred_element_type=f32)
    y = jnp.tanh(y * bnss_ref[0] + bnss_ref[1])               # (BbN, H)

    # ---- GC_Block stages (statically unrolled; S is small) -----------------
    # TODO(synk): for large num_stage switch to lax.fori_loop to bound live ranges.
    for i in range(S):
        s = jnp.dot(y.astype(bf16), gcbw_ref[2 * i], preferred_element_type=f32)
        h = jnp.dot(att_ref[1 + 2 * i], s.astype(bf16), preferred_element_type=f32)
        h = jnp.tanh(h * bnss_ref[2 + 4 * i] + bnss_ref[3 + 4 * i])
        s = jnp.dot(h.astype(bf16), gcbw_ref[2 * i + 1], preferred_element_type=f32)
        h2 = jnp.dot(att_ref[2 + 2 * i], s.astype(bf16), preferred_element_type=f32)
        y = jnp.tanh(h2 * bnss_ref[4 + 4 * i] + bnss_ref[5 + 4 * i]) + y

    # ---- gc7 + residual add with the module input x -------------------------
    s = jnp.dot(y.astype(bf16), g7w_ref[...], preferred_element_type=f32)
    out = jnp.dot(att_ref[1 + 2 * S], s.astype(bf16), preferred_element_type=f32)
    out_ref[...] = out + g7b_ref[...] + x


# ----------------------------------------------------------------------------
# One-time parameter packing (BN folding, block-diagonalisation, bf16 casts).
# ----------------------------------------------------------------------------

def pack_st_conv_params(params, seq_len, batch_block):
    f32, bf16 = jnp.float32, jnp.bfloat16
    wconv = params["conv1"]["w"]                       # (N, N, K)
    N, _, K = wconv.shape
    L = seq_len - K + 1
    H = params["gc1"]["w"].shape[1]
    Fin = params["gc7"]["w"].shape[1]
    S = len(params["gcbs"])
    assert S >= 1
    assert params["gc1"]["w"].shape[0] == Fin + L
    Bb = batch_block
    eye = jnp.eye(Bb, dtype=f32)
    bd = lambda m: jnp.kron(eye, m)                    # (n,n) -> (Bb*n, Bb*n)

    # conv1: per-tap block-diag weights; fold conv bias + eval bnc1.
    wc = jnp.stack([bd(wconv[:, :, k]) for k in range(K)]).astype(bf16)
    c1_scale, c1_shift = params["bnc1"]
    c1_scale = c1_scale.reshape(N, L)
    c1_shift = params["conv1"]["b"][:, None] * c1_scale + c1_shift.reshape(N, L)
    c1ss = jnp.stack([jnp.tile(c1_scale, (Bb, 1)),
                      jnp.tile(c1_shift, (Bb, 1))]).astype(f32)

    def fold(bn, bias):                                # gc bias + eval-mode BN
        sc, sh = bn
        sc = sc.reshape(N, H)
        return sc, bias[None, :] * sc + sh.reshape(N, H)

    g1, g7 = params["gc1"], params["gc7"]
    ss = list(fold(params["bn1"], g1["b"]))
    atts = [g1["att"]]
    gcbw = []
    for blk in params["gcbs"]:
        ss += list(fold(blk["bn1"], blk["gc1"]["b"]))
        ss += list(fold(blk["bn2"], blk["gc2"]["b"]))
        atts += [blk["gc1"]["att"], blk["gc2"]["att"]]
        gcbw += [blk["gc1"]["w"], blk["gc2"]["w"]]
    atts.append(g7["att"])

    return {
        "wc": wc,                                                  # (K, BbN, BbN) bf16
        "c1ss": c1ss,                                              # (2, BbN, L)  f32
        "g1w": g1["w"].astype(bf16),                               # (L+Fin, H)   bf16
        "att": jnp.stack([bd(a) for a in atts]).astype(bf16),      # (2+2S, BbN, BbN)
        "bnss": jnp.tile(jnp.stack(ss), (1, Bb, 1)).astype(f32),   # (2+4S, BbN, H)
        "gcbw": jnp.stack(gcbw).astype(bf16),                      # (2S, H, H)
        "g7w": g7["w"].astype(bf16),                               # (H, Fin)
        "g7b": g7["b"].reshape(1, Fin).astype(f32),                # (1, Fin)
    }


# ----------------------------------------------------------------------------
# Forward wrapper (minimal per-call glue + one pallas_call)
# ----------------------------------------------------------------------------

def st_conv_forward(packed, x, seq, residual=True):
    if not residual:
        # Reference forward leaves y1 undefined when residual=False.
        raise ValueError("ST_conv.forward is only defined for residual=True")

    B, N, Fin = x.shape
    T = seq.shape[1]
    K = packed["wc"].shape[0]
    BbN = packed["wc"].shape[1]
    Bb = BbN // N
    L = packed["c1ss"].shape[2]
    H = packed["bnss"].shape[2]
    S = packed["gcbw"].shape[0] // 2
    assert B % Bb == 0 and L == T - K + 1
    nblk = B // Bb

    x_flat = x.reshape(B * N, Fin).astype(jnp.float32)
    # seq (B, T, N) -> NCW (B, N, T) -> batch-flattened rows (B*N, T)
    seq_flat = jnp.transpose(seq, (0, 2, 1)).reshape(B * N, T).astype(jnp.float32)

    batch_map = lambda i: (i, 0)
    const2 = lambda i: (0, 0)
    const3 = lambda i: (0, 0, 0)

    out = pl.pallas_call(
        _fused_st_conv_kernel,
        out_shape=jax.ShapeDtypeStruct((B * N, Fin), jnp.float32),
        grid=(nblk,),
        in_specs=[
            pl.BlockSpec((BbN, Fin), batch_map),           # x (flat)
            pl.BlockSpec((BbN, T), batch_map),             # seq (NCW, flat)
            pl.BlockSpec((K, BbN, BbN), const3),           # conv1 block-diag taps
            pl.BlockSpec((2, BbN, L), const3),             # bnc1 scale/shift
            pl.BlockSpec((Fin + L, H), const2),            # gc1 weight
            pl.BlockSpec((2 + 2 * S, BbN, BbN), const3),   # attentions
            pl.BlockSpec((2 + 4 * S, BbN, H), const3),     # BN scale/shift stack
            pl.BlockSpec((2 * S, H, H), const3),           # GC_Block weights
            pl.BlockSpec((H, Fin), const2),                # gc7 weight
            pl.BlockSpec((1, Fin), const2),                # gc7 bias
        ],
        out_specs=pl.BlockSpec((BbN, Fin), batch_map),
        compiler_params=pltpu.CompilerParams(
            dimension_semantics=("parallel",)),            # v7x: shard batch blocks
    )(x_flat, seq_flat, packed["wc"], packed["c1ss"], packed["g1w"],
      packed["att"], packed["bnss"], packed["gcbw"], packed["g7w"], packed["g7b"])
    return out.reshape(B, N, Fin)


# ----------------------------------------------------------------------------
# Parameter construction (deterministic, mirrors module __init__ shapes)
# ----------------------------------------------------------------------------

def _uniform(key, shape, bound):
    return jax.random.uniform(key, shape, jnp.float32, -bound, bound)


def make_bn(num_features, eps=1e-5):
    """Eval-mode BatchNorm1d (PyTorch defaults) -> per-feature scale/shift."""
    gamma = jnp.ones((num_features,), jnp.float32)
    beta = jnp.zeros((num_features,), jnp.float32)
    running_mean = jnp.zeros((num_features,), jnp.float32)
    running_var = jnp.ones((num_features,), jnp.float32)
    scale = gamma / jnp.sqrt(running_var + eps)
    shift = beta - running_mean * scale
    return scale, shift


def make_graph_conv(key, in_features, out_features, node_n):
    kw, ka, kb = jax.random.split(key, 3)
    stdv = 1.0 / math.sqrt(out_features)
    return {
        "w": _uniform(kw, (in_features, out_features), stdv),
        "att": _uniform(ka, (node_n, node_n), stdv),
        "b": _uniform(kb, (out_features,), stdv),
    }


def make_conv1d(key, channels, ksize):
    kw, kb = jax.random.split(key)
    bound = 1.0 / math.sqrt(channels * ksize)
    return {
        "w": _uniform(kw, (channels, channels, ksize), bound),   # [out, in, K]
        "b": _uniform(kb, (channels,), bound),
    }


def init_params(key, input_feature, hidden_feature, num_stage, node_n, seq_len):
    keys = jax.random.split(key, 8 + num_stage)
    p = {}
    p["conv1"] = make_conv1d(keys[0], node_n, 5)
    # conv2 / conv3 / bnc2 / bnc3 / Iconv1 / bn7 mirror __init__ but their
    # outputs are never consumed by forward(), so they are not computed.
    p["conv2"] = make_conv1d(keys[1], node_n, 7)
    p["conv3"] = make_conv1d(keys[2], node_n, 10)
    p["bnc1"] = make_bn(node_n * (seq_len - 4))
    p["bnc2"] = make_bn(node_n * (seq_len - 6))
    p["bnc3"] = make_bn(node_n * (seq_len - 9))
    p["gc1"] = make_graph_conv(keys[3], input_feature + 16, hidden_feature, node_n)
    p["bn1"] = make_bn(node_n * hidden_feature)
    p["gcbs"] = []
    for i in range(num_stage):
        k1, k2 = jax.random.split(keys[4 + i])
        p["gcbs"].append({
            "gc1": make_graph_conv(k1, hidden_feature, hidden_feature, node_n),
            "bn1": make_bn(node_n * hidden_feature),
            "gc2": make_graph_conv(k2, hidden_feature, hidden_feature, node_n),
            "bn2": make_bn(node_n * hidden_feature),
        })
    p["gc7"] = make_graph_conv(keys[4 + num_stage], hidden_feature, input_feature, node_n)
    return p


# ----------------------------------------------------------------------------
# Main
# ----------------------------------------------------------------------------

if __name__ == "__main__":
    B = 2
    node_n = 48
    input_feature = 16           # dct_n
    hidden_feature = 32
    num_stage = 1
    seq_len = 20                 # bnc1 size node_n*16 implies T - 4 = 16

    key = jax.random.PRNGKey(0)
    kp, kx, ks = jax.random.split(key, 3)

    params = init_params(kp, input_feature, hidden_feature, num_stage,
                         node_n, seq_len)

    x = jax.random.normal(kx, (B, node_n, input_feature), jnp.float32)
    seq = jax.random.normal(ks, (B, seq_len, node_n), jnp.float32)

    # Whole batch in one grid step (best for v5e/v6e).  On v7x pass
    # batch_block=B//2 so each TensorCore takes one fat step.
    packed = pack_st_conv_params(params, seq_len=seq_len, batch_block=B)

    fwd = jax.jit(st_conv_forward)
    out = jax.block_until_ready(fwd(packed, x, seq))

    assert out.shape == (B, node_n, input_feature), out.shape
    assert jnp.all(jnp.isfinite(out))
    print("KERNEL_OK")
</pallas_src>

<mosaic_0001>
module attributes {stable_mosaic.version = 11 : i64} {
  func.func @_fused_st_conv_kernel(%arg0: i32, %arg1: memref<96x16xf32, #tpu.memory_space<vmem>>, %arg2: memref<96x20xf32, #tpu.memory_space<vmem>>, %arg3: memref<5x96x96xbf16, #tpu.memory_space<vmem>>, %arg4: memref<2x96x16xf32, #tpu.memory_space<vmem>>, %arg5: memref<32x32xbf16, #tpu.memory_space<vmem>>, %arg6: memref<4x96x96xbf16, #tpu.memory_space<vmem>>, %arg7: memref<6x96x32xf32, #tpu.memory_space<vmem>>, %arg8: memref<2x32x32xbf16, #tpu.memory_space<vmem>>, %arg9: memref<32x16xbf16, #tpu.memory_space<vmem>>, %arg10: memref<1x16xf32, #tpu.memory_space<vmem>>, %arg11: memref<96x16xf32, #tpu.memory_space<vmem>>) attributes {dimension_semantics = [#tpu.dimension_semantics<parallel>], iteration_bounds = array<i64: 1>, scalar_prefetch = 0 : i64, scratch_operands = 0 : i64, tpu.core_type = #tpu.core_type<tc>, window_params = [{transform_indices = @transform_0, window_bounds = array<i64: 96, 16>}, {transform_indices = @transform_1, window_bounds = array<i64: 96, 20>}, {pipeline_mode = #tpu.pipeline_mode<synchronous>, transform_indices = @transform_2, window_bounds = array<i64: 5, 96, 96>}, {pipeline_mode = #tpu.pipeline_mode<synchronous>, transform_indices = @transform_3, window_bounds = array<i64: 2, 96, 16>}, {pipeline_mode = #tpu.pipeline_mode<synchronous>, transform_indices = @transform_4, window_bounds = array<i64: 32, 32>}, {pipeline_mode = #tpu.pipeline_mode<synchronous>, transform_indices = @transform_5, window_bounds = array<i64: 4, 96, 96>}, {pipeline_mode = #tpu.pipeline_mode<synchronous>, transform_indices = @transform_6, window_bounds = array<i64: 6, 96, 32>}, {pipeline_mode = #tpu.pipeline_mode<synchronous>, transform_indices = @transform_7, window_bounds = array<i64: 2, 32, 32>}, {pipeline_mode = #tpu.pipeline_mode<synchronous>, transform_indices = @transform_8, window_bounds = array<i64: 32, 16>}, {pipeline_mode = #tpu.pipeline_mode<synchronous>, transform_indices = @transform_9, window_bounds = array<i64: 1, 16>}, {transform_indices = @transform_10, window_bounds = array<i64: 96, 16>}]} {
    %c0 = arith.constant 0 : index
    %c0_0 = arith.constant 0 : index
    %0 = vector.load %arg1[%c0, %c0_0] : memref<96x16xf32, #tpu.memory_space<vmem>>, vector<96x16xf32>
    %c0_1 = arith.constant 0 : index
    %c0_2 = arith.constant 0 : index
    %1 = vector.load %arg2[%c0_1, %c0_2] : memref<96x20xf32, #tpu.memory_space<vmem>>, vector<96x20xf32>
    %2 = arith.truncf %1 : vector<96x20xf32> to vector<96x20xbf16>
    %c0_3 = arith.constant 0 : index
    %c0_4 = arith.constant 0 : index
    %c0_5 = arith.constant 0 : index
    %3 = vector.load %arg3[%c0_3, %c0_4, %c0_5] : memref<5x96x96xbf16, #tpu.memory_space<vmem>>, vector<1x96x96xbf16>
    %4 = vector.shape_cast %3 : vector<1x96x96xbf16> to vector<96x96xbf16>
    %5 = vector.extract_strided_slice %2 {offsets = [0, 0], sizes = [96, 16], strides = [1, 1]} : vector<96x20xbf16> to vector<96x16xbf16>
    %cst = arith.constant dense<0.000000e+00> : vector<96x16xf32>
    %6 = tpu.matmul %4, %5, %cst {dimension_numbers = #tpu.dot_dimension_numbers<[1], [0], [0], [1], [0, 0, 1, 1], [], []>} : vector<96x96xbf16>, vector<96x16xbf16>, vector<96x16xf32> -> vector<96x16xf32>
    %c1 = arith.constant 1 : index
    %c0_6 = arith.constant 0 : index
    %c0_7 = arith.constant 0 : index
    %7 = vector.load %arg3[%c1, %c0_6, %c0_7] : memref<5x96x96xbf16, #tpu.memory_space<vmem>>, vector<1x96x96xbf16>
    %8 = vector.shape_cast %7 : vector<1x96x96xbf16> to vector<96x96xbf16>
    %9 = vector.extract_strided_slice %2 {offsets = [0, 1], sizes = [96, 16], strides = [1, 1]} : vector<96x20xbf16> to vector<96x16xbf16>
    %cst_8 = arith.constant dense<0.000000e+00> : vector<96x16xf32>
    %10 = tpu.matmul %8, %9, %cst_8 {dimension_numbers = #tpu.dot_dimension_numbers<[1], [0], [0], [1], [0, 0, 1, 1], [], []>} : vector<96x96xbf16>, vector<96x16xbf16>, vector<96x16xf32> -> vector<96x16xf32>
    %11 = arith.addf %6, %10 : vector<96x16xf32>
    %c2 = arith.constant 2 : index
    %c0_9 = arith.constant 0 : index
    %c0_10 = arith.constant 0 : index
    %12 = vector.load %arg3[%c2, %c0_9, %c0_10] : memref<5x96x96xbf16, #tpu.memory_space<vmem>>, vector<1x96x96xbf16>
    %13 = vector.shape_cast %12 : vector<1x96x96xbf16> to vector<96x96xbf16>
    %14 = vector.extract_strided_slice %2 {offsets = [0, 2], sizes = [96, 16], strides = [1, 1]} : vector<96x20xbf16> to vector<96x16xbf16>
    %cst_11 = arith.constant dense<0.000000e+00> : vector<96x16xf32>
    %15 = tpu.matmul %13, %14, %cst_11 {dimension_numbers = #tpu.dot_dimension_numbers<[1], [0], [0], [1], [0, 0, 1, 1], [], []>} : vector<96x96xbf16>, vector<96x16xbf16>, vector<96x16xf32> -> vector<96x16xf32>
    %16 = arith.addf %11, %15 : vector<96x16xf32>
    %c3 = arith.constant 3 : index
    %c0_12 = arith.constant 0 : index
    %c0_13 = arith.constant 0 : index
    %17 = vector.load %arg3[%c3, %c0_12, %c0_13] : memref<5x96x96xbf16, #tpu.memory_space<vmem>>, vector<1x96x96xbf16>
    %18 = vector.shape_cast %17 : vector<1x96x96xbf16> to vector<96x96xbf16>
    %19 = vector.extract_strided_slice %2 {offsets = [0, 3], sizes = [96, 16], strides = [1, 1]} : vector<96x20xbf16> to vector<96x16xbf16>
    %cst_14 = arith.constant dense<0.000000e+00> : vector<96x16xf32>
    %20 = tpu.matmul %18, %19, %cst_14 {dimension_numbers = #tpu.dot_dimension_numbers<[1], [0], [0], [1], [0, 0, 1, 1], [], []>} : vector<96x96xbf16>, vector<96x16xbf16>, vector<96x16xf32> -> vector<96x16xf32>
    %21 = arith.addf %16, %20 : vector<96x16xf32>
    %c4 = arith.constant 4 : index
    %c0_15 = arith.constant 0 : index
    %c0_16 = arith.constant 0 : index
    %22 = vector.load %arg3[%c4, %c0_15, %c0_16] : memref<5x96x96xbf16, #tpu.memory_space<vmem>>, vector<1x96x96xbf16>
    %23 = vector.shape_cast %22 : vector<1x96x96xbf16> to vector<96x96xbf16>
    %24 = vector.extract_strided_slice %2 {offsets = [0, 4], sizes = [96, 16], strides = [1, 1]} : vector<96x20xbf16> to vector<96x16xbf16>
    %cst_17 = arith.constant dense<0.000000e+00> : vector<96x16xf32>
    %25 = tpu.matmul %23, %24, %cst_17 {dimension_numbers = #tpu.dot_dimension_numbers<[1], [0], [0], [1], [0, 0, 1, 1], [], []>} : vector<96x96xbf16>, vector<96x16xbf16>, vector<96x16xf32> -> vector<96x16xf32>
    %26 = arith.addf %21, %25 : vector<96x16xf32>
    %c0_18 = arith.constant 0 : index
    %c0_19 = arith.constant 0 : index
    %c0_20 = arith.constant 0 : index
    %27 = vector.load %arg4[%c0_18, %c0_19, %c0_20] : memref<2x96x16xf32, #tpu.memory_space<vmem>>, vector<1x96x16xf32>
    %28 = vector.shape_cast %27 : vector<1x96x16xf32> to vector<96x16xf32>
    %29 = arith.mulf %26, %28 : vector<96x16xf32>
    %c1_21 = arith.constant 1 : index
    %c0_22 = arith.constant 0 : index
    %c0_23 = arith.constant 0 : index
    %30 = vector.load %arg4[%c1_21, %c0_22, %c0_23] : memref<2x96x16xf32, #tpu.memory_space<vmem>>, vector<1x96x16xf32>
    %31 = vector.shape_cast %30 : vector<1x96x16xf32> to vector<96x16xf32>
    %32 = arith.addf %29, %31 : vector<96x16xf32>
    %33 = math.tanh %32 : vector<96x16xf32>
    %34 = tpu.concatenate %33, %0 in 1 : vector<96x16xf32>, vector<96x16xf32> -> vector<96x32xf32>
    %35 = arith.truncf %34 : vector<96x32xf32> to vector<96x32xbf16>
    %c0_24 = arith.constant 0 : index
    %c0_25 = arith.constant 0 : index
    %36 = vector.load %arg5[%c0_24, %c0_25] : memref<32x32xbf16, #tpu.memory_space<vmem>>, vector<32x32xbf16>
    %cst_26 = arith.constant dense<0.000000e+00> : vector<96x32xf32>
    %37 = tpu.matmul %35, %36, %cst_26 {dimension_numbers = #tpu.dot_dimension_numbers<[1], [0], [0], [1], [0, 0, 1, 1], [], []>} : vector<96x32xbf16>, vector<32x32xbf16>, vector<96x32xf32> -> vector<96x32xf32>
    %c0_27 = arith.constant 0 : index
    %c0_28 = arith.constant 0 : index
    %c0_29 = arith.constant 0 : index
    %38 = vector.load %arg6[%c0_27, %c0_28, %c0_29] : memref<4x96x96xbf16, #tpu.memory_space<vmem>>, vector<1x96x96xbf16>
    %39 = vector.shape_cast %38 : vector<1x96x96xbf16> to vector<96x96xbf16>
    %40 = arith.truncf %37 : vector<96x32xf32> to vector<96x32xbf16>
    %cst_30 = arith.constant dense<0.000000e+00> : vector<96x32xf32>
    %41 = tpu.matmul %39, %40, %cst_30 {dimension_numbers = #tpu.dot_dimension_numbers<[1], [0], [0], [1], [0, 0, 1, 1], [], []>} : vector<96x96xbf16>, vector<96x32xbf16>, vector<96x32xf32> -> vector<96x32xf32>
    %c0_31 = arith.constant 0 : index
    %c0_32 = arith.constant 0 : index
    %c0_33 = arith.constant 0 : index
    %42 = vector.load %arg7[%c0_31, %c0_32, %c0_33] : memref<6x96x32xf32, #tpu.memory_space<vmem>>, vector<1x96x32xf32>
    %43 = vector.shape_cast %42 : vector<1x96x32xf32> to vector<96x32xf32>
    %44 = arith.mulf %41, %43 : vector<96x32xf32>
    %c1_34 = arith.constant 1 : index
    %c0_35 = arith.constant 0 : index
    %c0_36 = arith.constant 0 : index
    %45 = vector.load %arg7[%c1_34, %c0_35, %c0_36] : memref<6x96x32xf32, #tpu.memory_space<vmem>>, vector<1x96x32xf32>
    %46 = vector.shape_cast %45 : vector<1x96x32xf32> to vector<96x32xf32>
    %47 = arith.addf %44, %46 : vector<96x32xf32>
    %48 = math.tanh %47 : vector<96x32xf32>
    %49 = arith.truncf %48 : vector<96x32xf32> to vector<96x32xbf16>
    %c0_37 = arith.constant 0 : index
    %c0_38 = arith.constant 0 : index
    %c0_39 = arith.constant 0 : index
    %50 = vector.load %arg8[%c0_37, %c0_38, %c0_39] : memref<2x32x32xbf16, #tpu.memory_space<vmem>>, vector<1x32x32xbf16>
    %51 = vector.shape_cast %50 : vector<1x32x32xbf16> to vector<32x32xbf16>
    %cst_40 = arith.constant dense<0.000000e+00> : vector<96x32xf32>
    %52 = tpu.matmul %49, %51, %cst_40 {dimension_numbers = #tpu.dot_dimension_numbers<[1], [0], [0], [1], [0, 0, 1, 1], [], []>} : vector<96x32xbf16>, vector<32x32xbf16>, vector<96x32xf32> -> vector<96x32xf32>
    %c1_41 = arith.constant 1 : index
    %c0_42 = arith.constant 0 : index
    %c0_43 = arith.constant 0 : index
    %53 = vector.load %arg6[%c1_41, %c0_42, %c0_43] : memref<4x96x96xbf16, #tpu.memory_space<vmem>>, vector<1x96x96xbf16>
    %54 = vector.shape_cast %53 : vector<1x96x96xbf16> to vector<96x96xbf16>
    %55 = arith.truncf %52 : vector<96x32xf32> to vector<96x32xbf16>
    %cst_44 = arith.constant dense<0.000000e+00> : vector<96x32xf32>
    %56 = tpu.matmul %54, %55, %cst_44 {dimension_numbers = #tpu.dot_dimension_numbers<[1], [0], [0], [1], [0, 0, 1, 1], [], []>} : vector<96x96xbf16>, vector<96x32xbf16>, vector<96x32xf32> -> vector<96x32xf32>
    %c2_45 = arith.constant 2 : index
    %c0_46 = arith.constant 0 : index
    %c0_47 = arith.constant 0 : index
    %57 = vector.load %arg7[%c2_45, %c0_46, %c0_47] : memref<6x96x32xf32, #tpu.memory_space<vmem>>, vector<1x96x32xf32>
    %58 = vector.shape_cast %57 : vector<1x96x32xf32> to vector<96x32xf32>
    %59 = arith.mulf %56, %58 : vector<96x32xf32>
    %c3_48 = arith.constant 3 : index
    %c0_49 = arith.constant 0 : index
    %c0_50 = arith.constant 0 : index
    %60 = vector.load %arg7[%c3_48, %c0_49, %c0_50] : memref<6x96x32xf32, #tpu.memory_space<vmem>>, vector<1x96x32xf32>
    %61 = vector.shape_cast %60 : vector<1x96x32xf32> to vector<96x32xf32>
    %62 = arith.addf %59, %61 : vector<96x32xf32>
    %63 = math.tanh %62 : vector<96x32xf32>
    %64 = arith.truncf %63 : vector<96x32xf32> to vector<96x32xbf16>
    %c1_51 = arith.constant 1 : index
    %c0_52 = arith.constant 0 : index
    %c0_53 = arith.constant 0 : index
    %65 = vector.load %arg8[%c1_51, %c0_52, %c0_53] : memref<2x32x32xbf16, #tpu.memory_space<vmem>>, vector<1x32x32xbf16>
    %66 = vector.shape_cast %65 : vector<1x32x32xbf16> to vector<32x32xbf16>
    %cst_54 = arith.constant dense<0.000000e+00> : vector<96x32xf32>
    %67 = tpu.matmul %64, %66, %cst_54 {dimension_numbers = #tpu.dot_dimension_numbers<[1], [0], [0], [1], [0, 0, 1, 1], [], []>} : vector<96x32xbf16>, vector<32x32xbf16>, vector<96x32xf32> -> vector<96x32xf32>
    %c2_55 = arith.constant 2 : index
    %c0_56 = arith.constant 0 : index
    %c0_57 = arith.constant 0 : index
    %68 = vector.load %arg6[%c2_55, %c0_56, %c0_57] : memref<4x96x96xbf16, #tpu.memory_space<vmem>>, vector<1x96x96xbf16>
    %69 = vector.shape_cast %68 : vector<1x96x96xbf16> to vector<96x96xbf16>
    %70 = arith.truncf %67 : vector<96x32xf32> to vector<96x32xbf16>
    %cst_58 = arith.constant dense<0.000000e+00> : vector<96x32xf32>
    %71 = tpu.matmul %69, %70, %cst_58 {dimension_numbers = #tpu.dot_dimension_numbers<[1], [0], [0], [1], [0, 0, 1, 1], [], []>} : vector<96x96xbf16>, vector<96x32xbf16>, vector<96x32xf32> -> vector<96x32xf32>
    %c4_59 = arith.constant 4 : index
    %c0_60 = arith.constant 0 : index
    %c0_61 = arith.constant 0 : index
    %72 = vector.load %arg7[%c4_59, %c0_60, %c0_61] : memref<6x96x32xf32, #tpu.memory_space<vmem>>, vector<1x96x32xf32>
    %73 = vector.shape_cast %72 : vector<1x96x32xf32> to vector<96x32xf32>
    %74 = arith.mulf %71, %73 : vector<96x32xf32>
    %c5 = arith.constant 5 : index
    %c0_62 = arith.constant 0 : index
    %c0_63 = arith.constant 0 : index
    %75 = vector.load %arg7[%c5, %c0_62, %c0_63] : memref<6x96x32xf32, #tpu.memory_space<vmem>>, vector<1x96x32xf32>
    %76 = vector.shape_cast %75 : vector<1x96x32xf32> to vector<96x32xf32>
    %77 = arith.addf %74, %76 : vector<96x32xf32>
    %78 = math.tanh %77 : vector<96x32xf32>
    %79 = arith.addf %78, %48 : vector<96x32xf32>
    %80 = arith.truncf %79 : vector<96x32xf32> to vector<96x32xbf16>
    %c0_64 = arith.constant 0 : index
    %c0_65 = arith.constant 0 : index
    %81 = vector.load %arg9[%c0_64, %c0_65] : memref<32x16xbf16, #tpu.memory_space<vmem>>, vector<32x16xbf16>
    %cst_66 = arith.constant dense<0.000000e+00> : vector<96x16xf32>
    %82 = tpu.matmul %80, %81, %cst_66 {dimension_numbers = #tpu.dot_dimension_numbers<[1], [0], [0], [1], [0, 0, 1, 1], [], []>} : vector<96x32xbf16>, vector<32x16xbf16>, vector<96x16xf32> -> vector<96x16xf32>
    %c3_67 = arith.constant 3 : index
    %c0_68 = arith.constant 0 : index
    %c0_69 = arith.constant 0 : index
    %83 = vector.load %arg6[%c3_67, %c0_68, %c0_69] : memref<4x96x96xbf16, #tpu.memory_space<vmem>>, vector<1x96x96xbf16>
    %84 = vector.shape_cast %83 : vector<1x96x96xbf16> to vector<96x96xbf16>
    %85 = arith.truncf %82 : vector<96x16xf32> to vector<96x16xbf16>
    %cst_70 = arith.constant dense<0.000000e+00> : vector<96x16xf32>
    %86 = tpu.matmul %84, %85, %cst_70 {dimension_numbers = #tpu.dot_dimension_numbers<[1], [0], [0], [1], [0, 0, 1, 1], [], []>} : vector<96x96xbf16>, vector<96x16xbf16>, vector<96x16xf32> -> vector<96x16xf32>
    %c0_71 = arith.constant 0 : index
    %c0_72 = arith.constant 0 : index
    %87 = vector.load %arg10[%c0_71, %c0_72] : memref<1x16xf32, #tpu.memory_space<vmem>>, vector<1x16xf32>
    %88 = vector.broadcast %87 : vector<1x16xf32> to vector<96x16xf32>
    %89 = arith.addf %86, %88 : vector<96x16xf32>
    %90 = arith.addf %89, %0 : vector<96x16xf32>
    %c0_73 = arith.constant 0 : index
    %c0_74 = arith.constant 0 : index
    %91 = vector.load %arg11[%c0_73, %c0_74] : memref<96x16xf32, #tpu.memory_space<vmem>>, vector<96x16xf32>
    tpu.vector_store %arg11[%c0_73, %c0_74], %90 {strides = array<i32>} : memref<96x16xf32, #tpu.memory_space<vmem>>, vector<96x16xf32>,
    return
  }
  func.func @transform_0(%arg0: i32) -> (i32, i32) {
    %c0_i32 = arith.constant 0 : i32
    %c0_i32_0 = arith.constant 0 : i32
    return %arg0, %c0_i32 : i32, i32
  }
  func.func @transform_1(%arg0: i32) -> (i32, i32) {
    %c0_i32 = arith.constant 0 : i32
    %c0_i32_0 = arith.constant 0 : i32
    return %arg0, %c0_i32 : i32, i32
  }
  func.func @transform_2(%arg0: i32) -> (i32, i32, i32) {
    %c0_i32 = arith.constant 0 : i32
    %c0_i32_0 = arith.constant 0 : i32
    %c0_i32_1 = arith.constant 0 : i32
    %c0_i32_2 = arith.constant 0 : i32
    return %c0_i32, %c0_i32_0, %c0_i32_1 : i32, i32, i32
  }
  func.func @transform_3(%arg0: i32) -> (i32, i32, i32) {
    %c0_i32 = arith.constant 0 : i32
    %c0_i32_0 = arith.constant 0 : i32
    %c0_i32_1 = arith.constant 0 : i32
    %c0_i32_2 = arith.constant 0 : i32
    return %c0_i32, %c0_i32_0, %c0_i32_1 : i32, i32, i32
  }
  func.func @transform_4(%arg0: i32) -> (i32, i32) {
    %c0_i32 = arith.constant 0 : i32
    %c0_i32_0 = arith.constant 0 : i32
    %c0_i32_1 = arith.constant 0 : i32
    return %c0_i32, %c0_i32_0 : i32, i32
  }
  func.func @transform_5(%arg0: i32) -> (i32, i32, i32) {
    %c0_i32 = arith.constant 0 : i32
    %c0_i32_0 = arith.constant 0 : i32
    %c0_i32_1 = arith.constant 0 : i32
    %c0_i32_2 = arith.constant 0 : i32
    return %c0_i32, %c0_i32_0, %c0_i32_1 : i32, i32, i32
  }
  func.func @transform_6(%arg0: i32) -> (i32, i32, i32) {
    %c0_i32 = arith.constant 0 : i32
    %c0_i32_0 = arith.constant 0 : i32
    %c0_i32_1 = arith.constant 0 : i32
    %c0_i32_2 = arith.constant 0 : i32
    return %c0_i32, %c0_i32_0, %c0_i32_1 : i32, i32, i32
  }
  func.func @transform_7(%arg0: i32) -> (i32, i32, i32) {
    %c0_i32 = arith.constant 0 : i32
    %c0_i32_0 = arith.constant 0 : i32
    %c0_i32_1 = arith.constant 0 : i32
    %c0_i32_2 = arith.constant 0 : i32
    return %c0_i32, %c0_i32_0, %c0_i32_1 : i32, i32, i32
  }
  func.func @transform_8(%arg0: i32) -> (i32, i32) {
    %c0_i32 = arith.constant 0 : i32
    %c0_i32_0 = arith.constant 0 : i32
    %c0_i32_1 = arith.constant 0 : i32
    return %c0_i32, %c0_i32_0 : i32, i32
  }
  func.func @transform_9(%arg0: i32) -> (i32, i32) {
    %c0_i32 = arith.constant 0 : i32
    %c0_i32_0 = arith.constant 0 : i32
    %c0_i32_1 = arith.constant 0 : i32
    return %c0_i32, %c0_i32_0 : i32, i32
  }
  func.func @transform_10(%arg0: i32) -> (i32, i32) {
    %c0_i32 = arith.constant 0 : i32
    %c0_i32_0 = arith.constant 0 : i32
    return %arg0, %c0_i32 : i32, i32
  }
}

</mosaic_0001>

<llo_original>
// kernel: st_conv_forward.1
$region0: #{st_conv_forward.1}
  #allocation0 [shape = 'u32[]', space=smem, size = 0x4, offset = 0x4, fixed_abs, tag = 'smem constant byte address 0x4 - core index']
  #allocation1 [shape = 'u32[72,128]{1,0:T(1,128)}', space=vmem, size = 0x9000, scoped, tag = 'internal scratch']
  %s0 = inlined_call_operand.vmem [shape: f32[96,16], index: 0, kind: input, shape index: {}]
  %s1 = inlined_call_operand.vmem [shape: f32[96,20], index: 1, kind: input, shape index: {}]
  %s2 = inlined_call_operand.vmem [shape: bf16[5,96,96], index: 2, kind: input, shape index: {}]
  %s3 = inlined_call_operand.vmem [shape: f32[2,96,16], index: 3, kind: input, shape index: {}]
  %s4 = inlined_call_operand.vmem [shape: bf16[32,32], index: 4, kind: input, shape index: {}]
  %s5 = inlined_call_operand.vmem [shape: bf16[4,96,96], index: 5, kind: input, shape index: {}]
  %s6 = inlined_call_operand.vmem [shape: f32[6,96,32], index: 6, kind: input, shape index: {}]
  %s7 = inlined_call_operand.vmem [shape: bf16[2,32,32], index: 7, kind: input, shape index: {}]
  %s8 = inlined_call_operand.vmem [shape: bf16[32,16], index: 8, kind: input, shape index: {}]
  %s9 = inlined_call_operand.vmem [shape: f32[1,16], index: 9, kind: input, shape index: {}]
  %s10 = inlined_call_operand.vmem [shape: f32[96,16], index: 10, kind: output, shape index: {}]
  %s11 = sld [smem:[#allocation0]]
  $region50: #{st_conv_forward.1} parent=0
    _
  %s13 = ssub.s32 1, %s11
  %s14 = scalar_select 0, %s13, %s11
  // Predicated region
  $region2: #{st_conv_forward.1} parent=0 // pred_check
    _
  $region3: #{st_conv_forward.1} parent=0 // pred_check_branch
    %16 = sbr.rel (0) target = $region5
  $region4: #{st_conv_forward.1} parent=0 // pred_region
    _
  $region5: #{st_conv_forward.1} parent=0 // pred_fallthru
    _
  // Predicated region
  $region6: #{st_conv_forward.1} parent=0 // pred_check
    _
  $region7: #{st_conv_forward.1} parent=0 // pred_check_branch
    %18 = sbr.rel (0) target = $region9
  $region8: #{st_conv_forward.1} parent=0 // pred_region
    _
  $region9: #{st_conv_forward.1} parent=0 // pred_fallthru
    _
  // Predicated region
  $region10: #{st_conv_forward.1} parent=0 // pred_check
    _
  $region11: #{st_conv_forward.1} parent=0 // pred_check_branch
    %20 = sbr.rel (0) target = $region13
  $region12: #{st_conv_forward.1} parent=0 // pred_region
    _
  $region13: #{st_conv_forward.1} parent=0 // pred_fallthru
    _
  // Predicated region
  $region14: #{st_conv_forward.1} parent=0 // pred_check
    _
  $region15: #{st_conv_forward.1} parent=0 // pred_check_branch
    %22 = sbr.rel (0) target = $region17
  $region16: #{st_conv_forward.1} parent=0 // pred_region
    _
  $region17: #{st_conv_forward.1} parent=0 // pred_fallthru
    _
  // Predicated region
  $region18: #{st_conv_forward.1} parent=0 // pred_check
    _
  $region19: #{st_conv_forward.1} parent=0 // pred_check_branch
    %24 = sbr.rel (0) target = $region21
  $region20: #{st_conv_forward.1} parent=0 // pred_region
    _
  $region21: #{st_conv_forward.1} parent=0 // pred_fallthru
    _
  // Predicated region
  $region22: #{st_conv_forward.1} parent=0 // pred_check
    _
  $region23: #{st_conv_forward.1} parent=0 // pred_check_branch
    %26 = sbr.rel (0) target = $region25
  $region24: #{st_conv_forward.1} parent=0 // pred_region
    _
  $region25: #{st_conv_forward.1} parent=0 // pred_fallthru
    _
  // Predicated region
  $region26: #{st_conv_forward.1} parent=0 // pred_check
    _
  $region27: #{st_conv_forward.1} parent=0 // pred_check_branch
    %28 = sbr.rel (0) target = $region29
  $region28: #{st_conv_forward.1} parent=0 // pred_region
    _
  $region29: #{st_conv_forward.1} parent=0 // pred_fallthru
    _
  // Predicated region
  $region30: #{st_conv_forward.1} parent=0 // pred_check
    _
  $region31: #{st_conv_forward.1} parent=0 // pred_check_branch
    %30 = sbr.rel (0) target = $region33
  $region32: #{st_conv_forward.1} parent=0 // pred_region
    _
  $region33: #{st_conv_forward.1} parent=0 // pred_fallthru
    _
  // Predicated region
  $region34: #{st_conv_forward.1} parent=0 // pred_check
    _
  $region35: #{st_conv_forward.1} parent=0 // pred_check_branch
    %32 = sbr.rel (0) target = $region37
  $region36: #{st_conv_forward.1} parent=0 // pred_region
    _
  $region37: #{st_conv_forward.1} parent=0 // pred_fallthru
    _
  // Predicated region
  $region38: #{st_conv_forward.1} parent=0 // pred_check
    _
  $region39: #{st_conv_forward.1} parent=0 // pred_check_branch
    %34 = sbr.rel (0) target = $region41
  $region40: #{st_conv_forward.1} parent=0 // pred_region
    _
  $region41: #{st_conv_forward.1} parent=0 // pred_fallthru
    _
  %v36 = vld [vmem:[%s0] sm:$0xff]
  %v37 = vld [vmem:[%s0 + $0x8] sm:$0xff]
  %v38 = vld [vmem:[%s0 + $0x10] sm:$0xff]
  %v39 = vld [vmem:[%s0 + $0x18] sm:$0xff]
  %v40 = vld [vmem:[%s0 + $0x20] sm:$0xff]
  %v41 = vld [vmem:[%s0 + $0x28] sm:$0xff]
  %v42 = vld [vmem:[%s0 + $0x30] sm:$0xff]
  %v43 = vld [vmem:[%s0 + $0x38] sm:$0xff]
  %v44 = vld [vmem:[%s0 + $0x40] sm:$0xff]
  %v45 = vld [vmem:[%s0 + $0x48] sm:$0xff]
  %v46 = vld [vmem:[%s0 + $0x50] sm:$0xff]
  %v47 = vld [vmem:[%s0 + $0x58] sm:$0xff]
  %v48 = vld [vmem:[%s1] sm:$0xff]
  %v49 = vld [vmem:[%s1 + $0x8] sm:$0xff]
  %v50 = vld [vmem:[%s1 + $0x10] sm:$0xff]
  %v51 = vld [vmem:[%s1 + $0x18] sm:$0xff]
  %v52 = vld [vmem:[%s1 + $0x20] sm:$0xff]
  %v53 = vld [vmem:[%s1 + $0x28] sm:$0xff]
  %v54 = vld [vmem:[%s1 + $0x30] sm:$0xff]
  %v55 = vld [vmem:[%s1 + $0x38] sm:$0xff]
  %v56 = vld [vmem:[%s1 + $0x40] sm:$0xff]
  %v57 = vld [vmem:[%s1 + $0x48] sm:$0xff]
  %v58 = vld [vmem:[%s1 + $0x50] sm:$0xff]
  %v59 = vld [vmem:[%s1 + $0x58] sm:$0xff]
  %v60 = vpack.c.bf16 %v48, %v48
  %v61 = vpack.c.bf16 %v49, %v49
  %v62 = vpack.c.bf16 %v50, %v50
  %v63 = vpack.c.bf16 %v51, %v51
  %v64 = vpack.c.bf16 %v52, %v52
  %v65 = vpack.c.bf16 %v53, %v53
  %v66 = vpack.c.bf16 %v54, %v54
  %v67 = vpack.c.bf16 %v55, %v55
  %v68 = vpack.c.bf16 %v56, %v56
  %v69 = vpack.c.bf16 %v57, %v57
  %v70 = vpack.c.bf16 %v58, %v58
  %v71 = vpack.c.bf16 %v59, %v59
  %v72 = vld [vmem:[%s2] sm:$0xf]
  %v73 = vld [vmem:[%s2 + $0x4] sm:$0xf]
  %v74 = vld [vmem:[%s2 + $0x8] sm:$0xf]
  %v75 = vld [vmem:[%s2 + $0xc] sm:$0xf]
  %v76 = vld [vmem:[%s2 + $0x10] sm:$0xf]
  %v77 = vld [vmem:[%s2 + $0x14] sm:$0xf]
  %v78 = vld [vmem:[%s2 + $0x18] sm:$0xf]
  %v79 = vld [vmem:[%s2 + $0x1c] sm:$0xf]
  %v80 = vld [vmem:[%s2 + $0x20] sm:$0xf]
  %v81 = vld [vmem:[%s2 + $0x24] sm:$0xf]
  %v82 = vld [vmem:[%s2 + $0x28] sm:$0xf]
  %v83 = vld [vmem:[%s2 + $0x2c] sm:$0xf]
  %s84 = scalar_lea.vmem %s2, 48
  %v85 = vld [vmem:[%s84] sm:$0xf]
  %v86 = vld [vmem:[%s84 + $0x4] sm:$0xf]
  %v87 = vld [vmem:[%s84 + $0x8] sm:$0xf]
  %v88 = vld [vmem:[%s84 + $0xc] sm:$0xf]
  %v89 = vld [vmem:[%s84 + $0x10] sm:$0xf]
  %v90 = vld [vmem:[%s84 + $0x14] sm:$0xf]
  %v91 = vld [vmem:[%s84 + $0x18] sm:$0xf]
  %v92 = vld [vmem:[%s84 + $0x1c] sm:$0xf]
  %v93 = vld [vmem:[%s84 + $0x20] sm:$0xf]
  %v94 = vld [vmem:[%s84 + $0x24] sm:$0xf]
  %v95 = vld [vmem:[%s84 + $0x28] sm:$0xf]
  %v96 = vld [vmem:[%s84 + $0x2c] sm:$0xf]
  %v109 = vunpack.c.l.b16 %v85
  %v110 = vunpack.c.l.b16 %v86
  %v111 = vunpack.c.l.b16 %v87
  %v112 = vunpack.c.l.b16 %v88
  %v113 = vunpack.c.l.b16 %v89
  %v114 = vunpack.c.l.b16 %v90
  %v115 = vunpack.c.l.b16 %v91
  %v116 = vunpack.c.l.b16 %v92
  %v117 = vunpack.c.l.b16 %v93
  %v118 = vunpack.c.l.b16 %v94
  %v119 = vunpack.c.l.b16 %v95
  %v120 = vunpack.c.l.b16 %v96
  %v121 = vpack.c.b16 %v110, %v109
  %v122 = vpack.c.b16 %v112, %v111
  %v123 = vpack.c.b16 %v114, %v113
  %v124 = vpack.c.b16 %v116, %v115
  %v125 = vpack.c.b16 %v118, %v117
  %v126 = vpack.c.b16 %v120, %v119
  %v139 = vunpack.c.l.b16 %v60
  %v140 = vunpack.c.l.b16 %v61
  %v141 = vunpack.c.l.b16 %v62
  %v142 = vunpack.c.l.b16 %v63
  %v143 = vunpack.c.l.b16 %v64
  %v144 = vunpack.c.l.b16 %v65
  %v145 = vunpack.c.l.b16 %v66
  %v146 = vunpack.c.l.b16 %v67
  %v147 = vunpack.c.l.b16 %v68
  %v148 = vunpack.c.l.b16 %v69
  %v149 = vunpack.c.l.b16 %v70
  %v150 = vunpack.c.l.b16 %v71
  %v151 = vpack.c.b16 %v140, %v139
  %v152 = vpack.c.b16 %v142, %v141
  %v153 = vpack.c.b16 %v144, %v143
  %v154 = vpack.c.b16 %v146, %v145
  %v155 = vpack.c.b16 %v148, %v147
  %v156 = vpack.c.b16 %v150, %v149
  %157 = vrot.lane.b32.xlu0 %v151, 127
  %v158 = vpop.permute.xlu0 %157
  %159 = vrot.lane.b32.xlu0 %v152, 127
  %v160 = vpop.permute.xlu0 %159
  %161 = vrot.lane.b32.xlu0 %v153, 127
  %v162 = vpop.permute.xlu0 %161
  %163 = vrot.lane.b32.xlu0 %v154, 127
  %v164 = vpop.permute.xlu0 %163
  %165 = vrot.lane.b32.xlu0 %v155, 127
  %v166 = vpop.permute.xlu0 %165
  %167 = vrot.lane.b32.xlu0 %v156, 127
  %v168 = vpop.permute.xlu0 %167
  %vm175 = vcmask 785408
  %v177 = vsel %vm175, %v121, 0
  %v180 = vsel %vm175, %v122, 0
  %v183 = vsel %vm175, %v123, 0
  %v186 = vsel %vm175, %v124, 0
  %v189 = vsel %vm175, %v125, 0
  %v192 = vsel %vm175, %v126, 0
  %194 = vmatpush.bf16.msra.mxu0 0
  %195 = vmatpush.bf16.msra.mxu0 0
  %196 = vmatpush.bf16.msra.mxu0 %v168
  %197 = vmatpush.bf16.msra.mxu0 %v166
  %198 = vmatpush.bf16.msra.mxu0 %v164
  %199 = vmatpush.bf16.msra.mxu0 %v162
  %200 = vmatpush.bf16.msra.mxu0 %v160
  %201 = vmatpush.bf16.msra.mxu0 %v158
  %202 = vmatmul.bf16.gmra.mxu0 %v177
  %v203 = vpop.f32.mrf.mxu0
  %v204 = vadd.f32 0.0, %v203
  %v205 = vpop.f32.mrf.mxu0
  %v206 = vadd.f32 0.0, %v205
  %207 = vmatmul.bf16.gmra.mxu0 %v180
  %v208 = vpop.f32.mrf.mxu0
  %v209 = vadd.f32 0.0, %v208
  %v210 = vpop.f32.mrf.mxu0
  %v211 = vadd.f32 0.0, %v210
  %212 = vmatmul.bf16.gmra.mxu0 %v183
  %v213 = vpop.f32.mrf.mxu0
  %v214 = vadd.f32 0.0, %v213
  %v215 = vpop.f32.mrf.mxu0
  %v216 = vadd.f32 0.0, %v215
  %217 = vmatmul.bf16.gmra.mxu0 %v186
  %v218 = vpop.f32.mrf.mxu0
  %v219 = vadd.f32 0.0, %v218
  %v220 = vpop.f32.mrf.mxu0
  %v221 = vadd.f32 0.0, %v220
  %222 = vmatmul.bf16.gmra.mxu0 %v189
  %v223 = vpop.f32.mrf.mxu0
  %v224 = vadd.f32 0.0, %v223
  %v225 = vpop.f32.mrf.mxu0
  %v226 = vadd.f32 0.0, %v225
  %227 = vmatmul.bf16.gmra.mxu0 %v192
  %v228 = vpop.f32.mrf.mxu0
  %v229 = vadd.f32 0.0, %v228
  %v230 = vpop.f32.mrf.mxu0
  %v231 = vadd.f32 0.0, %v230
  %232 = vdwg.mxu0
  %v245 = vunpack.c.l.b16 %v72
  %v246 = vunpack.c.l.b16 %v73
  %v247 = vunpack.c.l.b16 %v74
  %v248 = vunpack.c.l.b16 %v75
  %v249 = vunpack.c.l.b16 %v76
  %v250 = vunpack.c.l.b16 %v77
  %v251 = vunpack.c.l.b16 %v78
  %v252 = vunpack.c.l.b16 %v79
  %v253 = vunpack.c.l.b16 %v80
  %v254 = vunpack.c.l.b16 %v81
  %v255 = vunpack.c.l.b16 %v82
  %v256 = vunpack.c.l.b16 %v83
  %v257 = vpack.c.b16 %v246, %v245
  %v258 = vpack.c.b16 %v248, %v247
  %v259 = vpack.c.b16 %v250, %v249
  %v260 = vpack.c.b16 %v252, %v251
  %v261 = vpack.c.b16 %v254, %v253
  %v262 = vpack.c.b16 %v256, %v255
  %v270 = vsel %vm175, %v257, 0
  %v273 = vsel %vm175, %v258, 0
  %v276 = vsel %vm175, %v259, 0
  %v279 = vsel %vm175, %v260, 0
  %v282 = vsel %vm175, %v261, 0
  %v285 = vsel %vm175, %v262, 0
  %287 = vmatpush.bf16.msra.mxu0 0
  %288 = vmatpush.bf16.msra.mxu0 0
  %289 = vmatpush.bf16.msra.mxu0 %v156
  %290 = vmatpush.bf16.msra.mxu0 %v155
  %291 = vmatpush.bf16.msra.mxu0 %v154
  %292 = vmatpush.bf16.msra.mxu0 %v153
  %293 = vmatpush.bf16.msra.mxu0 %v152
  %294 = vmatpush.bf16.msra.mxu0 %v151
  %295 = vmatmul.bf16.gmra.mxu0 %v270
  %v296 = vpop.f32.mrf.mxu0
  %v297 = vadd.f32 %v204, %v296
  %v298 = vpop.f32.mrf.mxu0
  %v299 = vadd.f32 %v206, %v298
  %300 = vmatmul.bf16.gmra.mxu0 %v273
  %v301 = vpop.f32.mrf.mxu0
  %v302 = vadd.f32 %v209, %v301
  %v303 = vpop.f32.mrf.mxu0
  %v304 = vadd.f32 %v211, %v303
  %305 = vmatmul.bf16.gmra.mxu0 %v276
  %v306 = vpop.f32.mrf.mxu0
  %v307 = vadd.f32 %v214, %v306
  %v308 = vpop.f32.mrf.mxu0
  %v309 = vadd.f32 %v216, %v308
  %310 = vmatmul.bf16.gmra.mxu0 %v279
  %v311 = vpop.f32.mrf.mxu0
  %v312 = vadd.f32 %v219, %v311
  %v313 = vpop.f32.mrf.mxu0
  %v314 = vadd.f32 %v221, %v313
  %315 = vmatmul.bf16.gmra.mxu0 %v282
  %v316 = vpop.f32.mrf.mxu0
  %v317 = vadd.f32 %v224, %v316
  %v318 = vpop.f32.mrf.mxu0
  %v319 = vadd.f32 %v226, %v318
  %320 = vmatmul.bf16.gmra.mxu0 %v285
  %v321 = vpop.f32.mrf.mxu0
  %v322 = vadd.f32 %v229, %v321
  %v323 = vpop.f32.mrf.mxu0
  %v324 = vadd.f32 %v231, %v323
  %325 = vdwg.mxu0
  %s326 = scalar_lea.vmem %s2, 96
  %v327 = vld [vmem:[%s326] sm:$0xf]
  %v328 = vld [vmem:[%s326 + $0x4] sm:$0xf]
  %v329 = vld [vmem:[%s326 + $0x8] sm:$0xf]
  %v330 = vld [vmem:[%s326 + $0xc] sm:$0xf]
  %v331 = vld [vmem:[%s326 + $0x10] sm:$0xf]
  %v332 = vld [vmem:[%s326 + $0x14] sm:$0xf]
  %v333 = vld [vmem:[%s326 + $0x18] sm:$0xf]
  %v334 = vld [vmem:[%s326 + $0x1c] sm:$0xf]
  %v335 = vld [vmem:[%s326 + $0x20] sm:$0xf]
  %v336 = vld [vmem:[%s326 + $0x24] sm:$0xf]
  %v337 = vld [vmem:[%s326 + $0x28] sm:$0xf]
  %v338 = vld [vmem:[%s326 + $0x2c] sm:$0xf]
  %v351 = vunpack.c.l.b16 %v327
  %v352 = vunpack.c.l.b16 %v328
  %v353 = vunpack.c.l.b16 %v329
  %v354 = vunpack.c.l.b16 %v330
  %v355 = vunpack.c.l.b16 %v331
  %v356 = vunpack.c.l.b16 %v332
  %v357 = vunpack.c.l.b16 %v333
  %v358 = vunpack.c.l.b16 %v334
  %v359 = vunpack.c.l.b16 %v335
  %v360 = vunpack.c.l.b16 %v336
  %v361 = vunpack.c.l.b16 %v337
  %v362 = vunpack.c.l.b16 %v338
  %v363 = vpack.c.b16 %v352, %v351
  %v364 = vpack.c.b16 %v354, %v353
  %v365 = vpack.c.b16 %v356, %v355
  %v366 = vpack.c.b16 %v358, %v357
  %v367 = vpack.c.b16 %v360, %v359
  %v368 = vpack.c.b16 %v362, %v361
  %369 = vrot.lane.b32.xlu0 %v151, 126
  %v370 = vpop.permute.xlu0 %369
  %371 = vrot.lane.b32.xlu0 %v152, 126
  %v372 = vpop.permute.xlu0 %371
  %373 = vrot.lane.b32.xlu0 %v153, 126
  %v374 = vpop.permute.xlu0 %373
  %375 = vrot.lane.b32.xlu0 %v154, 126
  %v376 = vpop.permute.xlu0 %375
  %377 = vrot.lane.b32.xlu0 %v155, 126
  %v378 = vpop.permute.xlu0 %377
  %379 = vrot.lane.b32.xlu0 %v156, 126
  %v380 = vpop.permute.xlu0 %379
  %v388 = vsel %vm175, %v363, 0
  %v391 = vsel %vm175, %v364, 0
  %v394 = vsel %vm175, %v365, 0
  %v397 = vsel %vm175, %v366, 0
  %v400 = vsel %vm175, %v367, 0
  %v403 = vsel %vm175, %v368, 0
  %405 = vmatpush.bf16.msra.mxu0 0
  %406 = vmatpush.bf16.msra.mxu0 0
  %407 = vmatpush.bf16.msra.mxu0 %v380
  %408 = vmatpush.bf16.msra.mxu0 %v378
  %409 = vmatpush.bf16.msra.mxu0 %v376
  %410 = vmatpush.bf16.msra.mxu0 %v374
  %411 = vmatpush.bf16.msra.mxu0 %v372
  %412 = vmatpush.bf16.msra.mxu0 %v370
  %413 = vmatmul.bf16.gmra.mxu0 %v388
  %v414 = vpop.f32.mrf.mxu0
  %v415 = vadd.f32 0.0, %v414
  %v416 = vpop.f32.mrf.mxu0
  %v417 = vadd.f32 0.0, %v416
  %418 = vmatmul.bf16.gmra.mxu0 %v391
  %v419 = vpop.f32.mrf.mxu0
  %v420 = vadd.f32 0.0, %v419
  %v421 = vpop.f32.mrf.mxu0
  %v422 = vadd.f32 0.0, %v421
  %423 = vmatmul.bf16.gmra.mxu0 %v394
  %v424 = vpop.f32.mrf.mxu0
  %v425 = vadd.f32 0.0, %v424
  %v426 = vpop.f32.mrf.mxu0
  %v427 = vadd.f32 0.0, %v426
  %428 = vmatmul.bf16.gmra.mxu0 %v397
  %v429 = vpop.f32.mrf.mxu0
  %v430 = vadd.f32 0.0, %v429
  %v431 = vpop.f32.mrf.mxu0
  %v432 = vadd.f32 0.0, %v431
  %433 = vmatmul.bf16.gmra.mxu0 %v400
  %v434 = vpop.f32.mrf.mxu0
  %v435 = vadd.f32 0.0, %v434
  %v436 = vpop.f32.mrf.mxu0
  %v437 = vadd.f32 0.0, %v436
  %438 = vmatmul.bf16.gmra.mxu0 %v403
  %v439 = vpop.f32.mrf.mxu0
  %v440 = vadd.f32 0.0, %v439
  %v441 = vpop.f32.mrf.mxu0
  %v442 = vadd.f32 0.0, %v441
  %443 = vdwg.mxu0
  %v444 = vadd.f32 %v297, %v415
  %v445 = vadd.f32 %v299, %v417
  %v446 = vadd.f32 %v302, %v420
  %v447 = vadd.f32 %v304, %v422
  %v448 = vadd.f32 %v307, %v425
  %v449 = vadd.f32 %v309, %v427
  %v450 = vadd.f32 %v312, %v430
  %v451 = vadd.f32 %v314, %v432
  %v452 = vadd.f32 %v317, %v435
  %v453 = vadd.f32 %v319, %v437
  %v454 = vadd.f32 %v322, %v440
  %v455 = vadd.f32 %v324, %v442
  %s456 = scalar_lea.vmem %s2, 144
  %v457 = vld [vmem:[%s456] sm:$0xf]
  %v458 = vld [vmem:[%s456 + $0x4] sm:$0xf]
  %v459 = vld [vmem:[%s456 + $0x8] sm:$0xf]
  %v460 = vld [vmem:[%s456 + $0xc] sm:$0xf]
  %v461 = vld [vmem:[%s456 + $0x10] sm:$0xf]
  %v462 = vld [vmem:[%s456 + $0x14] sm:$0xf]
  %v463 = vld [vmem:[%s456 + $0x18] sm:$0xf]
  %v464 = vld [vmem:[%s456 + $0x1c] sm:$0xf]
  %v465 = vld [vmem:[%s456 + $0x20] sm:$0xf]
  %v466 = vld [vmem:[%s456 + $0x24] sm:$0xf]
  %v467 = vld [vmem:[%s456 + $0x28] sm:$0xf]
  %v468 = vld [vmem:[%s456 + $0x2c] sm:$0xf]
  %v481 = vunpack.c.l.b16 %v457
  %v482 = vunpack.c.l.b16 %v458
  %v483 = vunpack.c.l.b16 %v459
  %v484 = vunpack.c.l.b16 %v460
  %v485 = vunpack.c.l.b16 %v461
  %v486 = vunpack.c.l.b16 %v462
  %v487 = vunpack.c.l.b16 %v463
  %v488 = vunpack.c.l.b16 %v464
  %v489 = vunpack.c.l.b16 %v465
  %v490 = vunpack.c.l.b16 %v466
  %v491 = vunpack.c.l.b16 %v467
  %v492 = vunpack.c.l.b16 %v468
  %v493 = vpack.c.b16 %v482, %v481
  %v494 = vpack.c.b16 %v484, %v483
  %v495 = vpack.c.b16 %v486, %v485
  %v496 = vpack.c.b16 %v488, %v487
  %v497 = vpack.c.b16 %v490, %v489
  %v498 = vpack.c.b16 %v492, %v491
  %499 = vrot.lane.b32.xlu0 %v151, 125
  %v500 = vpop.permute.xlu0 %499
  %501 = vrot.lane.b32.xlu0 %v152, 125
  %v502 = vpop.permute.xlu0 %501
  %503 = vrot.lane.b32.xlu0 %v153, 125
  %v504 = vpop.permute.xlu0 %503
  %505 = vrot.lane.b32.xlu0 %v154, 125
  %v506 = vpop.permute.xlu0 %505
  %507 = vrot.lane.b32.xlu0 %v155, 125
  %v508 = vpop.permute.xlu0 %507
  %509 = vrot.lane.b32.xlu0 %v156, 125
  %v510 = vpop.permute.xlu0 %509
  %v518 = vsel %vm175, %v493, 0
  %v521 = vsel %vm175, %v494, 0
  %v524 = vsel %vm175, %v495, 0
  %v527 = vsel %vm175, %v496, 0
  %v530 = vsel %vm175, %v497, 0
  %v533 = vsel %vm175, %v498, 0
  %535 = vmatpush.bf16.msra.mxu0 0
  %536 = vmatpush.bf16.msra.mxu0 0
  %537 = vmatpush.bf16.msra.mxu0 %v510
  %538 = vmatpush.bf16.msra.mxu0 %v508
  %539 = vmatpush.bf16.msra.mxu0 %v506
  %540 = vmatpush.bf16.msra.mxu0 %v504
  %541 = vmatpush.bf16.msra.mxu0 %v502
  %542 = vmatpush.bf16.msra.mxu0 %v500
  %543 = vmatmul.bf16.gmra.mxu0 %v518
  %v544 = vpop.f32.mrf.mxu0
  %v545 = vadd.f32 0.0, %v544
  %v546 = vpop.f32.mrf.mxu0
  %v547 = vadd.f32 0.0, %v546
  %548 = vmatmul.bf16.gmra.mxu0 %v521
  %v549 = vpop.f32.mrf.mxu0
  %v550 = vadd.f32 0.0, %v549
  %v551 = vpop.f32.mrf.mxu0
  %v552 = vadd.f32 0.0, %v551
  %553 = vmatmul.bf16.gmra.mxu0 %v524
  %v554 = vpop.f32.mrf.mxu0
  %v555 = vadd.f32 0.0, %v554
  %v556 = vpop.f32.mrf.mxu0
  %v557 = vadd.f32 0.0, %v556
  %558 = vmatmul.bf16.gmra.mxu0 %v527
  %v559 = vpop.f32.mrf.mxu0
  %v560 = vadd.f32 0.0, %v559
  %v561 = vpop.f32.mrf.mxu0
  %v562 = vadd.f32 0.0, %v561
  %563 = vmatmul.bf16.gmra.mxu0 %v530
  %v564 = vpop.f32.mrf.mxu0
  %v565 = vadd.f32 0.0, %v564
  %v566 = vpop.f32.mrf.mxu0
  %v567 = vadd.f32 0.0, %v566
  %568 = vmatmul.bf16.gmra.mxu0 %v533
  %v569 = vpop.f32.mrf.mxu0
  %v570 = vadd.f32 0.0, %v569
  %v571 = vpop.f32.mrf.mxu0
  %v572 = vadd.f32 0.0, %v571
  %573 = vdwg.mxu0
  %v574 = vadd.f32 %v444, %v545
  %v575 = vadd.f32 %v445, %v547
  %v576 = vadd.f32 %v446, %v550
  %v577 = vadd.f32 %v447, %v552
  %v578 = vadd.f32 %v448, %v555
  %v579 = vadd.f32 %v449, %v557
  %v580 = vadd.f32 %v450, %v560
  %v581 = vadd.f32 %v451, %v562
  %v582 = vadd.f32 %v452, %v565
  %v583 = vadd.f32 %v453, %v567
  %v584 = vadd.f32 %v454, %v570
  %v585 = vadd.f32 %v455, %v572
  %s586 = scalar_lea.vmem %s2, 192
  %v587 = vld [vmem:[%s586] sm:$0xf]
  %v588 = vld [vmem:[%s586 + $0x4] sm:$0xf]
  %v589 = vld [vmem:[%s586 + $0x8] sm:$0xf]
  %v590 = vld [vmem:[%s586 + $0xc] sm:$0xf]
  %v591 = vld [vmem:[%s586 + $0x10] sm:$0xf]
  %v592 = vld [vmem:[%s586 + $0x14] sm:$0xf]
  %v593 = vld [vmem:[%s586 + $0x18] sm:$0xf]
  %v594 = vld [vmem:[%s586 + $0x1c] sm:$0xf]
  %v595 = vld [vmem:[%s586 + $0x20] sm:$0xf]
  %v596 = vld [vmem:[%s586 + $0x24] sm:$0xf]
  %v597 = vld [vmem:[%s586 + $0x28] sm:$0xf]
  %v598 = vld [vmem:[%s586 + $0x2c] sm:$0xf]
  %v611 = vunpack.c.l.b16 %v587
  %v612 = vunpack.c.l.b16 %v588
  %v613 = vunpack.c.l.b16 %v589
  %v614 = vunpack.c.l.b16 %v590
  %v615 = vunpack.c.l.b16 %v591
  %v616 = vunpack.c.l.b16 %v592
  %v617 = vunpack.c.l.b16 %v593
  %v618 = vunpack.c.l.b16 %v594
  %v619 = vunpack.c.l.b16 %v595
  %v620 = vunpack.c.l.b16 %v596
  %v621 = vunpack.c.l.b16 %v597
  %v622 = vunpack.c.l.b16 %v598
  %v623 = vpack.c.b16 %v612, %v611
  %v624 = vpack.c.b16 %v614, %v613
  %v625 = vpack.c.b16 %v616, %v615
  %v626 = vpack.c.b16 %v618, %v617
  %v627 = vpack.c.b16 %v620, %v619
  %v628 = vpack.c.b16 %v622, %v621
  %629 = vrot.lane.b32.xlu0 %v151, 124
  %v630 = vpop.permute.xlu0 %629
  %631 = vrot.lane.b32.xlu0 %v152, 124
  %v632 = vpop.permute.xlu0 %631
  %633 = vrot.lane.b32.xlu0 %v153, 124
  %v634 = vpop.permute.xlu0 %633
  %635 = vrot.lane.b32.xlu0 %v154, 124
  %v636 = vpop.permute.xlu0 %635
  %637 = vrot.lane.b32.xlu0 %v155, 124
  %v638 = vpop.permute.xlu0 %637
  %639 = vrot.lane.b32.xlu0 %v156, 124
  %v640 = vpop.permute.xlu0 %639
  %v648 = vsel %vm175, %v623, 0
  %v651 = vsel %vm175, %v624, 0
  %v654 = vsel %vm175, %v625, 0
  %v657 = vsel %vm175, %v626, 0
  %v660 = vsel %vm175, %v627, 0
  %v663 = vsel %vm175, %v628, 0
  %665 = vmatpush.bf16.msra.mxu0 0
  %666 = vmatpush.bf16.msra.mxu0 0
  %667 = vmatpush.bf16.msra.mxu0 %v640
  %668 = vmatpush.bf16.msra.mxu0 %v638
  %669 = vmatpush.bf16.msra.mxu0 %v636
  %670 = vmatpush.bf16.msra.mxu0 %v634
  %671 = vmatpush.bf16.msra.mxu0 %v632
  %672 = vmatpush.bf16.msra.mxu0 %v630
  %673 = vmatmul.bf16.gmra.mxu0 %v648
  %v674 = vpop.f32.mrf.mxu0
  %v675 = vadd.f32 0.0, %v674
  %v676 = vpop.f32.mrf.mxu0
  %v677 = vadd.f32 0.0, %v676
  %678 = vmatmul.bf16.gmra.mxu0 %v651
  %v679 = vpop.f32.mrf.mxu0
  %v680 = vadd.f32 0.0, %v679
  %v681 = vpop.f32.mrf.mxu0
  %v682 = vadd.f32 0.0, %v681
  %683 = vmatmul.bf16.gmra.mxu0 %v654
  %v684 = vpop.f32.mrf.mxu0
  %v685 = vadd.f32 0.0, %v684
  %v686 = vpop.f32.mrf.mxu0
  %v687 = vadd.f32 0.0, %v686
  %688 = vmatmul.bf16.gmra.mxu0 %v657
  %v689 = vpop.f32.mrf.mxu0
  %v690 = vadd.f32 0.0, %v689
  %v691 = vpop.f32.mrf.mxu0
  %v692 = vadd.f32 0.0, %v691
  %693 = vmatmul.bf16.gmra.mxu0 %v660
  %v694 = vpop.f32.mrf.mxu0
  %v695 = vadd.f32 0.0, %v694
  %v696 = vpop.f32.mrf.mxu0
  %v697 = vadd.f32 0.0, %v696
  %698 = vmatmul.bf16.gmra.mxu0 %v663
  %v699 = vpop.f32.mrf.mxu0
  %v700 = vadd.f32 0.0, %v699
  %v701 = vpop.f32.mrf.mxu0
  %v702 = vadd.f32 0.0, %v701
  %703 = vdwg.mxu0
  %v704 = vadd.f32 %v574, %v675
  %v705 = vadd.f32 %v575, %v677
  %v706 = vadd.f32 %v576, %v680
  %v707 = vadd.f32 %v577, %v682
  %v708 = vadd.f32 %v578, %v685
  %v709 = vadd.f32 %v579, %v687
  %v710 = vadd.f32 %v580, %v690
  %v711 = vadd.f32 %v581, %v692
  %v712 = vadd.f32 %v582, %v695
  %v713 = vadd.f32 %v583, %v697
  %v714 = vadd.f32 %v584, %v700
  %v715 = vadd.f32 %v585, %v702
  %v716 = vld [vmem:[%s3] sm:$0xff]
  %v717 = vld [vmem:[%s3 + $0x8] sm:$0xff]
  %v718 = vld [vmem:[%s3 + $0x10] sm:$0xff]
  %v719 = vld [vmem:[%s3 + $0x18] sm:$0xff]
  %v720 = vld [vmem:[%s3 + $0x20] sm:$0xff]
  %v721 = vld [vmem:[%s3 + $0x28] sm:$0xff]
  %v722 = vld [vmem:[%s3 + $0x30] sm:$0xff]
  %v723 = vld [vmem:[%s3 + $0x38] sm:$0xff]
  %v724 = vld [vmem:[%s3 + $0x40] sm:$0xff]
  %v725 = vld [vmem:[%s3 + $0x48] sm:$0xff]
  %v726 = vld [vmem:[%s3 + $0x50] sm:$0xff]
  %v727 = vld [vmem:[%s3 + $0x58] sm:$0xff]
  %v728 = vmul.f32 %v704, %v716
  %v729 = vmul.f32 %v705, %v717
  %v730 = vmul.f32 %v706, %v718
  %v731 = vmul.f32 %v707, %v719
  %v732 = vmul.f32 %v708, %v720
  %v733 = vmul.f32 %v709, %v721
  %v734 = vmul.f32 %v710, %v722
  %v735 = vmul.f32 %v711, %v723
  %v736 = vmul.f32 %v712, %v724
  %v737 = vmul.f32 %v713, %v725
  %v738 = vmul.f32 %v714, %v726
  %v739 = vmul.f32 %v715, %v727
  %s740 = scalar_lea.vmem %s3, 96
  %v741 = vld [vmem:[%s740] sm:$0xff]
  %v742 = vld [vmem:[%s740 + $0x8] sm:$0xff]
  %v743 = vld [vmem:[%s740 + $0x10] sm:$0xff]
  %v744 = vld [vmem:[%s740 + $0x18] sm:$0xff]
  %v745 = vld [vmem:[%s740 + $0x20] sm:$0xff]
  %v746 = vld [vmem:[%s740 + $0x28] sm:$0xff]
  %v747 = vld [vmem:[%s740 + $0x30] sm:$0xff]
  %v748 = vld [vmem:[%s740 + $0x38] sm:$0xff]
  %v749 = vld [vmem:[%s740 + $0x40] sm:$0xff]
  %v750 = vld [vmem:[%s740 + $0x48] sm:$0xff]
  %v751 = vld [vmem:[%s740 + $0x50] sm:$0xff]
  %v752 = vld [vmem:[%s740 + $0x58] sm:$0xff]
  %v753 = vadd.f32 %v728, %v741
  %v754 = vadd.f32 %v729, %v742
  %v755 = vadd.f32 %v730, %v743
  %v756 = vadd.f32 %v731, %v744
  %v757 = vadd.f32 %v732, %v745
  %v758 = vadd.f32 %v733, %v746
  %v759 = vadd.f32 %v734, %v747
  %v760 = vadd.f32 %v735, %v748
  %v761 = vadd.f32 %v736, %v749
  %v762 = vadd.f32 %v737, %v750
  %v763 = vadd.f32 %v738, %v751
  %v764 = vadd.f32 %v739, %v752
  %v765 = vtanh.pop %v753
  %v766 = vtanh.pop %v754
  %v767 = vtanh.pop %v755
  %v768 = vtanh.pop %v756
  %v769 = vtanh.pop %v757
  %v770 = vtanh.pop %v758
  %v771 = vtanh.pop %v759
  %v772 = vtanh.pop %v760
  %v773 = vtanh.pop %v761
  %v774 = vtanh.pop %v762
  %v775 = vtanh.pop %v763
  %v776 = vtanh.pop %v764
  %789 = vrot.lane.b32.xlu0 %v36, 16
  %v790 = vpop.permute.xlu0 %789
  %791 = vrot.lane.b32.xlu0 %v37, 16
  %v792 = vpop.permute.xlu0 %791
  %793 = vrot.lane.b32.xlu0 %v38, 16
  %v794 = vpop.permute.xlu0 %793
  %795 = vrot.lane.b32.xlu0 %v39, 16
  %v796 = vpop.permute.xlu0 %795
  %797 = vrot.lane.b32.xlu0 %v40, 16
  %v798 = vpop.permute.xlu0 %797
  %799 = vrot.lane.b32.xlu0 %v41, 16
  %v800 = vpop.permute.xlu0 %799
  %801 = vrot.lane.b32.xlu0 %v42, 16
  %v802 = vpop.permute.xlu0 %801
  %803 = vrot.lane.b32.xlu0 %v43, 16
  %v804 = vpop.permute.xlu0 %803
  %805 = vrot.lane.b32.xlu0 %v44, 16
  %v806 = vpop.permute.xlu0 %805
  %807 = vrot.lane.b32.xlu0 %v45, 16
  %v808 = vpop.permute.xlu0 %807
  %809 = vrot.lane.b32.xlu0 %v46, 16
  %v810 = vpop.permute.xlu0 %809
  %811 = vrot.lane.b32.xlu0 %v47, 16
  %v812 = vpop.permute.xlu0 %811
  %vm825 = vcmask 130048
  %v826 = vsel %vm825, %v765, %v790
  %v827 = vsel %vm825, %v766, %v792
  %v828 = vsel %vm825, %v767, %v794
  %v829 = vsel %vm825, %v768, %v796
  %v830 = vsel %vm825, %v769, %v798
  %v831 = vsel %vm825, %v770, %v800
  %v832 = vsel %vm825, %v771, %v802
  %v833 = vsel %vm825, %v772, %v804
  %v834 = vsel %vm825, %v773, %v806
  %v835 = vsel %vm825, %v774, %v808
  %v836 = vsel %vm825, %v775, %v810
  %v837 = vsel %vm825, %v776, %v812
  %v838 = vpack.c.bf16 %v827, %v826
  %v839 = vpack.c.bf16 %v829, %v828
  %v840 = vpack.c.bf16 %v831, %v830
  %v841 = vpack.c.bf16 %v833, %v832
  %v842 = vpack.c.bf16 %v835, %v834
  %v843 = vpack.c.bf16 %v837, %v836
  %v844 = vld [vmem:[%s4] sm:$0xf]
  %v845 = vld [vmem:[%s4 + $0x4] sm:$0xf]
  %v846 = vld [vmem:[%s4 + $0x8] sm:$0xf]
  %v847 = vld [vmem:[%s4 + $0xc] sm:$0xf]
  %v852 = vunpack.c.l.b16 %v844
  %v853 = vunpack.c.l.b16 %v845
  %v854 = vunpack.c.l.b16 %v846
  %v855 = vunpack.c.l.b16 %v847
  %v856 = vpack.c.b16 %v853, %v852
  %v857 = vpack.c.b16 %v855, %v854
  %vm860 = vcmask 261120
  %v862 = vsel %vm860, %v838, 0
  %v865 = vsel %vm860, %v839, 0
  %v868 = vsel %vm860, %v840, 0
  %v871 = vsel %vm860, %v841, 0
  %v874 = vsel %vm860, %v842, 0
  %v877 = vsel %vm860, %v843, 0
  %879 = vmatpush.bf16.msra.mxu0 0
  %880 = vmatpush.bf16.msra.mxu0 0
  %881 = vmatpush.bf16.msra.mxu0 0
  %882 = vmatpush.bf16.msra.mxu0 0
  %883 = vmatpush.bf16.msra.mxu0 0
  %884 = vmatpush.bf16.msra.mxu0 0
  %885 = vmatpush.bf16.msra.mxu0 %v857
  %886 = vmatpush.bf16.msra.mxu0 %v856
  %887 = vmatmul.bf16.gmra.mxu0 %v862
  %v888 = vpop.f32.mrf.mxu0
  %v889 = vadd.f32 0.0, %v888
  %v890 = vpop.f32.mrf.mxu0
  %v891 = vadd.f32 0.0, %v890
  %892 = vmatmul.bf16.gmra.mxu0 %v865
  %v893 = vpop.f32.mrf.mxu0
  %v894 = vadd.f32 0.0, %v893
  %v895 = vpop.f32.mrf.mxu0
  %v896 = vadd.f32 0.0, %v895
  %897 = vmatmul.bf16.gmra.mxu0 %v868
  %v898 = vpop.f32.mrf.mxu0
  %v899 = vadd.f32 0.0, %v898
  %v900 = vpop.f32.mrf.mxu0
  %v901 = vadd.f32 0.0, %v900
  %902 = vmatmul.bf16.gmra.mxu0 %v871
  %v903 = vpop.f32.mrf.mxu0
  %v904 = vadd.f32 0.0, %v903
  %v905 = vpop.f32.mrf.mxu0
  %v906 = vadd.f32 0.0, %v905
  %907 = vmatmul.bf16.gmra.mxu0 %v874
  %v908 = vpop.f32.mrf.mxu0
  %v909 = vadd.f32 0.0, %v908
  %v910 = vpop.f32.mrf.mxu0
  %v911 = vadd.f32 0.0, %v910
  %912 = vmatmul.bf16.gmra.mxu0 %v877
  %v913 = vpop.f32.mrf.mxu0
  %v914 = vadd.f32 0.0, %v913
  %v915 = vpop.f32.mrf.mxu0
  %v916 = vadd.f32 0.0, %v915
  %917 = vdwg.mxu0
  %v918 = vld [vmem:[%s5] sm:$0xf]
  %v919 = vld [vmem:[%s5 + $0x4] sm:$0xf]
  %v920 = vld [vmem:[%s5 + $0x8] sm:$0xf]
  %v921 = vld [vmem:[%s5 + $0xc] sm:$0xf]
  %v922 = vld [vmem:[%s5 + $0x10] sm:$0xf]
  %v923 = vld [vmem:[%s5 + $0x14] sm:$0xf]
  %v924 = vld [vmem:[%s5 + $0x18] sm:$0xf]
  %v925 = vld [vmem:[%s5 + $0x1c] sm:$0xf]
  %v926 = vld [vmem:[%s5 + $0x20] sm:$0xf]
  %v927 = vld [vmem:[%s5 + $0x24] sm:$0xf]
  %v928 = vld [vmem:[%s5 + $0x28] sm:$0xf]
  %v929 = vld [vmem:[%s5 + $0x2c] sm:$0xf]
  %v930 = vpack.c.bf16 %v891, %v889
  %v931 = vpack.c.bf16 %v896, %v894
  %v932 = vpack.c.bf16 %v901, %v899
  %v933 = vpack.c.bf16 %v906, %v904
  %v934 = vpack.c.bf16 %v911, %v909
  %v935 = vpack.c.bf16 %v916, %v914
  %v948 = vunpack.c.l.b16 %v918
  %v949 = vunpack.c.l.b16 %v919
  %v950 = vunpack.c.l.b16 %v920
  %v951 = vunpack.c.l.b16 %v921
  %v952 = vunpack.c.l.b16 %v922
  %v953 = vunpack.c.l.b16 %v923
  %v954 = vunpack.c.l.b16 %v924
  %v955 = vunpack.c.l.b16 %v925
  %v956 = vunpack.c.l.b16 %v926
  %v957 = vunpack.c.l.b16 %v927
  %v958 = vunpack.c.l.b16 %v928
  %v959 = vunpack.c.l.b16 %v929
  %v960 = vpack.c.b16 %v949, %v948
  %v961 = vpack.c.b16 %v951, %v950
  %v962 = vpack.c.b16 %v953, %v952
  %v963 = vpack.c.b16 %v955, %v954
  %v964 = vpack.c.b16 %v957, %v956
  %v965 = vpack.c.b16 %v959, %v958
  %v967 = vsel %vm175, %v960, 0
  %v970 = vsel %vm175, %v961, 0
  %v973 = vsel %vm175, %v962, 0
  %v976 = vsel %vm175, %v963, 0
  %v979 = vsel %vm175, %v964, 0
  %v982 = vsel %vm175, %v965, 0
  %984 = vmatpush.bf16.msra.mxu0 0
  %985 = vmatpush.bf16.msra.mxu0 0
  %986 = vmatpush.bf16.msra.mxu0 %v935
  %987 = vmatpush.bf16.msra.mxu0 %v934
  %988 = vmatpush.bf16.msra.mxu0 %v933
  %989 = vmatpush.bf16.msra.mxu0 %v932
  %990 = vmatpush.bf16.msra.mxu0 %v931
  %991 = vmatpush.bf16.msra.mxu0 %v930
  %992 = vmatmul.bf16.gmra.mxu0 %v967
  %v993 = vpop.f32.mrf.mxu0
  %v994 = vadd.f32 0.0, %v993
  %v995 = vpop.f32.mrf.mxu0
  %v996 = vadd.f32 0.0, %v995
  %997 = vmatmul.bf16.gmra.mxu0 %v970
  %v998 = vpop.f32.mrf.mxu0
  %v999 = vadd.f32 0.0, %v998
  %v1000 = vpop.f32.mrf.mxu0
  %v1001 = vadd.f32 0.0, %v1000
  %1002 = vmatmul.bf16.gmra.mxu0 %v973
  %v1003 = vpop.f32.mrf.mxu0
  %v1004 = vadd.f32 0.0, %v1003
  %v1005 = vpop.f32.mrf.mxu0
  %v1006 = vadd.f32 0.0, %v1005
  %1007 = vmatmul.bf16.gmra.mxu0 %v976
  %v1008 = vpop.f32.mrf.mxu0
  %v1009 = vadd.f32 0.0, %v1008
  %v1010 = vpop.f32.mrf.mxu0
  %v1011 = vadd.f32 0.0, %v1010
  %1012 = vmatmul.bf16.gmra.mxu0 %v979
  %v1013 = vpop.f32.mrf.mxu0
  %v1014 = vadd.f32 0.0, %v1013
  %v1015 = vpop.f32.mrf.mxu0
  %v1016 = vadd.f32 0.0, %v1015
  %1017 = vmatmul.bf16.gmra.mxu0 %v982
  %v1018 = vpop.f32.mrf.mxu0
  %v1019 = vadd.f32 0.0, %v1018
  %v1020 = vpop.f32.mrf.mxu0
  %v1021 = vadd.f32 0.0, %v1020
  %1022 = vdwg.mxu0
  %v1023 = vld [vmem:[%s6] sm:$0xff]
  %v1024 = vld [vmem:[%s6 + $0x8] sm:$0xff]
  %v1025 = vld [vmem:[%s6 + $0x10] sm:$0xff]
  %v1026 = vld [vmem:[%s6 + $0x18] sm:$0xff]
  %v1027 = vld [vmem:[%s6 + $0x20] sm:$0xff]
  %v1028 = vld [vmem:[%s6 + $0x28] sm:$0xff]
  %v1029 = vld [vmem:[%s6 + $0x30] sm:$0xff]
  %v1030 = vld [vmem:[%s6 + $0x38] sm:$0xff]
  %v1031 = vld [vmem:[%s6 + $0x40] sm:$0xff]
  %v1032 = vld [vmem:[%s6 + $0x48] sm:$0xff]
  %v1033 = vld [vmem:[%s6 + $0x50] sm:$0xff]
  %v1034 = vld [vmem:[%s6 + $0x58] sm:$0xff]
  %v1035 = vmul.f32 %v994, %v1023
  %v1036 = vmul.f32 %v996, %v1024
  %v1037 = vmul.f32 %v999, %v1025
  %v1038 = vmul.f32 %v1001, %v1026
  %v1039 = vmul.f32 %v1004, %v1027
  %v1040 = vmul.f32 %v1006, %v1028
  %v1041 = vmul.f32 %v1009, %v1029
  %v1042 = vmul.f32 %v1011, %v1030
  %v1043 = vmul.f32 %v1014, %v1031
  %v1044 = vmul.f32 %v1016, %v1032
  %v1045 = vmul.f32 %v1019, %v1033
  %v1046 = vmul.f32 %v1021, %v1034
  %s1047 = scalar_lea.vmem %s6, 96
  %v1048 = vld [vmem:[%s1047] sm:$0xff]
  %v1049 = vld [vmem:[%s1047 + $0x8] sm:$0xff]
  %v1050 = vld [vmem:[%s1047 + $0x10] sm:$0xff]
  %v1051 = vld [vmem:[%s1047 + $0x18] sm:$0xff]
  %v1052 = vld [vmem:[%s1047 + $0x20] sm:$0xff]
  %v1053 = vld [vmem:[%s1047 + $0x28] sm:$0xff]
  %v1054 = vld [vmem:[%s1047 + $0x30] sm:$0xff]
  %v1055 = vld [vmem:[%s1047 + $0x38] sm:$0xff]
  %v1056 = vld [vmem:[%s1047 + $0x40] sm:$0xff]
  %v1057 = vld [vmem:[%s1047 + $0x48] sm:$0xff]
  %v1058 = vld [vmem:[%s1047 + $0x50] sm:$0xff]
  %v1059 = vld [vmem:[%s1047 + $0x58] sm:$0xff]
  %v1060 = vadd.f32 %v1035, %v1048
  %v1061 = vadd.f32 %v1036, %v1049
  %v1062 = vadd.f32 %v1037, %v1050
  %v1063 = vadd.f32 %v1038, %v1051
  %v1064 = vadd.f32 %v1039, %v1052
  %v1065 = vadd.f32 %v1040, %v1053
  %v1066 = vadd.f32 %v1041, %v1054
  %v1067 = vadd.f32 %v1042, %v1055
  %v1068 = vadd.f32 %v1043, %v1056
  %v1069 = vadd.f32 %v1044, %v1057
  %v1070 = vadd.f32 %v1045, %v1058
  %v1071 = vadd.f32 %v1046, %v1059
  %v1072 = vtanh.pop %v1060
  %v1073 = vtanh.pop %v1061
  %v1074 = vtanh.pop %v1062
  %v1075 = vtanh.pop %v1063
  %v1076 = vtanh.pop %v1064
  %v1077 = vtanh.pop %v1065
  %v1078 = vtanh.pop %v1066
  %v1079 = vtanh.pop %v1067
  %v1080 = vtanh.pop %v1068
  %v1081 = vtanh.pop %v1069
  %v1082 = vtanh.pop %v1070
  %v1083 = vtanh.pop %v1071
  %v1084 = vpack.c.bf16 %v1073, %v1072
  %v1085 = vpack.c.bf16 %v1075, %v1074
  %v1086 = vpack.c.bf16 %v1077, %v1076
  %v1087 = vpack.c.bf16 %v1079, %v1078
  %v1088 = vpack.c.bf16 %v1081, %v1080
  %v1089 = vpack.c.bf16 %v1083, %v1082
  %v1090 = vld [vmem:[%s7] sm:$0xf]
  %v1091 = vld [vmem:[%s7 + $0x4] sm:$0xf]
  %v1092 = vld [vmem:[%s7 + $0x8] sm:$0xf]
  %v1093 = vld [vmem:[%s7 + $0xc] sm:$0xf]
  %v1098 = vunpack.c.l.b16 %v1090
  %v1099 = vunpack.c.l.b16 %v1091
  %v1100 = vunpack.c.l.b16 %v1092
  %v1101 = vunpack.c.l.b16 %v1093
  %v1102 = vpack.c.b16 %v1099, %v1098
  %v1103 = vpack.c.b16 %v1101, %v1100
  %v1107 = vsel %vm860, %v1084, 0
  %v1110 = vsel %vm860, %v1085, 0
  %v1113 = vsel %vm860, %v1086, 0
  %v1116 = vsel %vm860, %v1087, 0
  %v1119 = vsel %vm860, %v1088, 0
  %v1122 = vsel %vm860, %v1089, 0
  %1124 = vmatpush.bf16.msra.mxu0 0
  %1125 = vmatpush.bf16.msra.mxu0 0
  %1126 = vmatpush.bf16.msra.mxu0 0
  %1127 = vmatpush.bf16.msra.mxu0 0
  %1128 = vmatpush.bf16.msra.mxu0 0
  %1129 = vmatpush.bf16.msra.mxu0 0
  %1130 = vmatpush.bf16.msra.mxu0 %v1103
  %1131 = vmatpush.bf16.msra.mxu0 %v1102
  %1132 = vmatmul.bf16.gmra.mxu0 %v1107
  %v1133 = vpop.f32.mrf.mxu0
  %v1134 = vadd.f32 0.0, %v1133
  %v1135 = vpop.f32.mrf.mxu0
  %v1136 = vadd.f32 0.0, %v1135
  %1137 = vmatmul.bf16.gmra.mxu0 %v1110
  %v1138 = vpop.f32.mrf.mxu0
  %v1139 = vadd.f32 0.0, %v1138
  %v1140 = vpop.f32.mrf.mxu0
  %v1141 = vadd.f32 0.0, %v1140
  %1142 = vmatmul.bf16.gmra.mxu0 %v1113
  %v1143 = vpop.f32.mrf.mxu0
  %v1144 = vadd.f32 0.0, %v1143
  %v1145 = vpop.f32.mrf.mxu0
  %v1146 = vadd.f32 0.0, %v1145
  %1147 = vmatmul.bf16.gmra.mxu0 %v1116
  %v1148 = vpop.f32.mrf.mxu0
  %v1149 = vadd.f32 0.0, %v1148
  %v1150 = vpop.f32.mrf.mxu0
  %v1151 = vadd.f32 0.0, %v1150
  %1152 = vmatmul.bf16.gmra.mxu0 %v1119
  %v1153 = vpop.f32.mrf.mxu0
  %v1154 = vadd.f32 0.0, %v1153
  %v1155 = vpop.f32.mrf.mxu0
  %v1156 = vadd.f32 0.0, %v1155
  %1157 = vmatmul.bf16.gmra.mxu0 %v1122
  %v1158 = vpop.f32.mrf.mxu0
  %v1159 = vadd.f32 0.0, %v1158
  %v1160 = vpop.f32.mrf.mxu0
  %v1161 = vadd.f32 0.0, %v1160
  %1162 = vdwg.mxu0
  %s1163 = scalar_lea.vmem %s5, 48
  %v1164 = vld [vmem:[%s1163] sm:$0xf]
  %v1165 = vld [vmem:[%s1163 + $0x4] sm:$0xf]
  %v1166 = vld [vmem:[%s1163 + $0x8] sm:$0xf]
  %v1167 = vld [vmem:[%s1163 + $0xc] sm:$0xf]
  %v1168 = vld [vmem:[%s1163 + $0x10] sm:$0xf]
  %v1169 = vld [vmem:[%s1163 + $0x14] sm:$0xf]
  %v1170 = vld [vmem:[%s1163 + $0x18] sm:$0xf]
  %v1171 = vld [vmem:[%s1163 + $0x1c] sm:$0xf]
  %v1172 = vld [vmem:[%s1163 + $0x20] sm:$0xf]
  %v1173 = vld [vmem:[%s1163 + $0x24] sm:$0xf]
  %v1174 = vld [vmem:[%s1163 + $0x28] sm:$0xf]
  %v1175 = vld [vmem:[%s1163 + $0x2c] sm:$0xf]
  %v1176 = vpack.c.bf16 %v1136, %v1134
  %v1177 = vpack.c.bf16 %v1141, %v1139
  %v1178 = vpack.c.bf16 %v1146, %v1144
  %v1179 = vpack.c.bf16 %v1151, %v1149
  %v1180 = vpack.c.bf16 %v1156, %v1154
  %v1181 = vpack.c.bf16 %v1161, %v1159
  %v1194 = vunpack.c.l.b16 %v1164
  %v1195 = vunpack.c.l.b16 %v1165
  %v1196 = vunpack.c.l.b16 %v1166
  %v1197 = vunpack.c.l.b16 %v1167
  %v1198 = vunpack.c.l.b16 %v1168
  %v1199 = vunpack.c.l.b16 %v1169
  %v1200 = vunpack.c.l.b16 %v1170
  %v1201 = vunpack.c.l.b16 %v1171
  %v1202 = vunpack.c.l.b16 %v1172
  %v1203 = vunpack.c.l.b16 %v1173
  %v1204 = vunpack.c.l.b16 %v1174
  %v1205 = vunpack.c.l.b16 %v1175
  %v1206 = vpack.c.b16 %v1195, %v1194
  %v1207 = vpack.c.b16 %v1197, %v1196
  %v1208 = vpack.c.b16 %v1199, %v1198
  %v1209 = vpack.c.b16 %v1201, %v1200
  %v1210 = vpack.c.b16 %v1203, %v1202
  %v1211 = vpack.c.b16 %v1205, %v1204
  %v1213 = vsel %vm175, %v1206, 0
  %v1216 = vsel %vm175, %v1207, 0
  %v1219 = vsel %vm175, %v1208, 0
  %v1222 = vsel %vm175, %v1209, 0
  %v1225 = vsel %vm175, %v1210, 0
  %v1228 = vsel %vm175, %v1211, 0
  %1230 = vmatpush.bf16.msra.mxu0 0
  %1231 = vmatpush.bf16.msra.mxu0 0
  %1232 = vmatpush.bf16.msra.mxu0 %v1181
  %1233 = vmatpush.bf16.msra.mxu0 %v1180
  %1234 = vmatpush.bf16.msra.mxu0 %v1179
  %1235 = vmatpush.bf16.msra.mxu0 %v1178
  %1236 = vmatpush.bf16.msra.mxu0 %v1177
  %1237 = vmatpush.bf16.msra.mxu0 %v1176
  %1238 = vmatmul.bf16.gmra.mxu0 %v1213
  %v1239 = vpop.f32.mrf.mxu0
  %v1240 = vadd.f32 0.0, %v1239
  %v1241 = vpop.f32.mrf.mxu0
  %v1242 = vadd.f32 0.0, %v1241
  %1243 = vmatmul.bf16.gmra.mxu0 %v1216
  %v1244 = vpop.f32.mrf.mxu0
  %v1245 = vadd.f32 0.0, %v1244
  %v1246 = vpop.f32.mrf.mxu0
  %v1247 = vadd.f32 0.0, %v1246
  %1248 = vmatmul.bf16.gmra.mxu0 %v1219
  %v1249 = vpop.f32.mrf.mxu0
  %v1250 = vadd.f32 0.0, %v1249
  %v1251 = vpop.f32.mrf.mxu0
  %v1252 = vadd.f32 0.0, %v1251
  %1253 = vmatmul.bf16.gmra.mxu0 %v1222
  %v1254 = vpop.f32.mrf.mxu0
  %v1255 = vadd.f32 0.0, %v1254
  %v1256 = vpop.f32.mrf.mxu0
  %v1257 = vadd.f32 0.0, %v1256
  %1258 = vmatmul.bf16.gmra.mxu0 %v1225
  %v1259 = vpop.f32.mrf.mxu0
  %v1260 = vadd.f32 0.0, %v1259
  %v1261 = vpop.f32.mrf.mxu0
  %v1262 = vadd.f32 0.0, %v1261
  %1263 = vmatmul.bf16.gmra.mxu0 %v1228
  %v1264 = vpop.f32.mrf.mxu0
  %v1265 = vadd.f32 0.0, %v1264
  %v1266 = vpop.f32.mrf.mxu0
  %v1267 = vadd.f32 0.0, %v1266
  %1268 = vdwg.mxu0
  %s1269 = scalar_lea.vmem %s6, 192
  %v1270 = vld [vmem:[%s1269] sm:$0xff]
  %v1271 = vld [vmem:[%s1269 + $0x8] sm:$0xff]
  %v1272 = vld [vmem:[%s1269 + $0x10] sm:$0xff]
  %v1273 = vld [vmem:[%s1269 + $0x18] sm:$0xff]
  %v1274 = vld [vmem:[%s1269 + $0x20] sm:$0xff]
  %v1275 = vld [vmem:[%s1269 + $0x28] sm:$0xff]
  %v1276 = vld [vmem:[%s1269 + $0x30] sm:$0xff]
  %v1277 = vld [vmem:[%s1269 + $0x38] sm:$0xff]
  %v1278 = vld [vmem:[%s1269 + $0x40] sm:$0xff]
  %v1279 = vld [vmem:[%s1269 + $0x48] sm:$0xff]
  %v1280 = vld [vmem:[%s1269 + $0x50] sm:$0xff]
  %v1281 = vld [vmem:[%s1269 + $0x58] sm:$0xff]
  %v1282 = vmul.f32 %v1240, %v1270
  %v1283 = vmul.f32 %v1242, %v1271
  %v1284 = vmul.f32 %v1245, %v1272
  %v1285 = vmul.f32 %v1247, %v1273
  %v1286 = vmul.f32 %v1250, %v1274
  %v1287 = vmul.f32 %v1252, %v1275
  %v1288 = vmul.f32 %v1255, %v1276
  %v1289 = vmul.f32 %v1257, %v1277
  %v1290 = vmul.f32 %v1260, %v1278
  %v1291 = vmul.f32 %v1262, %v1279
  %v1292 = vmul.f32 %v1265, %v1280
  %v1293 = vmul.f32 %v1267, %v1281
  %s1294 = scalar_lea.vmem %s6, 288
  %v1295 = vld [vmem:[%s1294] sm:$0xff]
  %v1296 = vld [vmem:[%s1294 + $0x8] sm:$0xff]
  %v1297 = vld [vmem:[%s1294 + $0x10] sm:$0xff]
  %v1298 = vld [vmem:[%s1294 + $0x18] sm:$0xff]
  %v1299 = vld [vmem:[%s1294 + $0x20] sm:$0xff]
  %v1300 = vld [vmem:[%s1294 + $0x28] sm:$0xff]
  %v1301 = vld [vmem:[%s1294 + $0x30] sm:$0xff]
  %v1302 = vld [vmem:[%s1294 + $0x38] sm:$0xff]
  %v1303 = vld [vmem:[%s1294 + $0x40] sm:$0xff]
  %v1304 = vld [vmem:[%s1294 + $0x48] sm:$0xff]
  %v1305 = vld [vmem:[%s1294 + $0x50] sm:$0xff]
  %v1306 = vld [vmem:[%s1294 + $0x58] sm:$0xff]
  %v1307 = vadd.f32 %v1282, %v1295
  %v1308 = vadd.f32 %v1283, %v1296
  %v1309 = vadd.f32 %v1284, %v1297
  %v1310 = vadd.f32 %v1285, %v1298
  %v1311 = vadd.f32 %v1286, %v1299
  %v1312 = vadd.f32 %v1287, %v1300
  %v1313 = vadd.f32 %v1288, %v1301
  %v1314 = vadd.f32 %v1289, %v1302
  %v1315 = vadd.f32 %v1290, %v1303
  %v1316 = vadd.f32 %v1291, %v1304
  %v1317 = vadd.f32 %v1292, %v1305
  %v1318 = vadd.f32 %v1293, %v1306
  %v1319 = vtanh.pop %v1307
  %v1320 = vtanh.pop %v1308
  %v1321 = vtanh.pop %v1309
  %v1322 = vtanh.pop %v1310
  %v1323 = vtanh.pop %v1311
  %v1324 = vtanh.pop %v1312
  %v1325 = vtanh.pop %v1313
  %v1326 = vtanh.pop %v1314
  %v1327 = vtanh.pop %v1315
  %v1328 = vtanh.pop %v1316
  %v1329 = vtanh.pop %v1317
  %v1330 = vtanh.pop %v1318
  %v1331 = vpack.c.bf16 %v1320, %v1319
  %v1332 = vpack.c.bf16 %v1322, %v1321
  %v1333 = vpack.c.bf16 %v1324, %v1323
  %v1334 = vpack.c.bf16 %v1326, %v1325
  %v1335 = vpack.c.bf16 %v1328, %v1327
  %v1336 = vpack.c.bf16 %v1330, %v1329
  %s1337 = scalar_lea.vmem %s7, 16
  %v1338 = vld [vmem:[%s1337] sm:$0xf]
  %v1339 = vld [vmem:[%s1337 + $0x4] sm:$0xf]
  %v1340 = vld [vmem:[%s1337 + $0x8] sm:$0xf]
  %v1341 = vld [vmem:[%s1337 + $0xc] sm:$0xf]
  %v1346 = vunpack.c.l.b16 %v1338
  %v1347 = vunpack.c.l.b16 %v1339
  %v1348 = vunpack.c.l.b16 %v1340
  %v1349 = vunpack.c.l.b16 %v1341
  %v1350 = vpack.c.b16 %v1347, %v1346
  %v1351 = vpack.c.b16 %v1349, %v1348
  %v1355 = vsel %vm860, %v1331, 0
  %v1358 = vsel %vm860, %v1332, 0
  %v1361 = vsel %vm860, %v1333, 0
  %v1364 = vsel %vm860, %v1334, 0
  %v1367 = vsel %vm860, %v1335, 0
  %v1370 = vsel %vm860, %v1336, 0
  %1372 = vmatpush.bf16.msra.mxu0 0
  %1373 = vmatpush.bf16.msra.mxu0 0
  %1374 = vmatpush.bf16.msra.mxu0 0
  %1375 = vmatpush.bf16.msra.mxu0 0
  %1376 = vmatpush.bf16.msra.mxu0 0
  %1377 = vmatpush.bf16.msra.mxu0 0
  %1378 = vmatpush.bf16.msra.mxu0 %v1351
  %1379 = vmatpush.bf16.msra.mxu0 %v1350
  %1380 = vmatmul.bf16.gmra.mxu0 %v1355
  %v1381 = vpop.f32.mrf.mxu0
  %v1382 = vadd.f32 0.0, %v1381
  %v1383 = vpop.f32.mrf.mxu0
  %v1384 = vadd.f32 0.0, %v1383
  %1385 = vmatmul.bf16.gmra.mxu0 %v1358
  %v1386 = vpop.f32.mrf.mxu0
  %v1387 = vadd.f32 0.0, %v1386
  %v1388 = vpop.f32.mrf.mxu0
  %v1389 = vadd.f32 0.0, %v1388
  %1390 = vmatmul.bf16.gmra.mxu0 %v1361
  %v1391 = vpop.f32.mrf.mxu0
  %v1392 = vadd.f32 0.0, %v1391
  %v1393 = vpop.f32.mrf.mxu0
  %v1394 = vadd.f32 0.0, %v1393
  %1395 = vmatmul.bf16.gmra.mxu0 %v1364
  %v1396 = vpop.f32.mrf.mxu0
  %v1397 = vadd.f32 0.0, %v1396
  %v1398 = vpop.f32.mrf.mxu0
  %v1399 = vadd.f32 0.0, %v1398
  %1400 = vmatmul.bf16.gmra.mxu0 %v1367
  %v1401 = vpop.f32.mrf.mxu0
  %v1402 = vadd.f32 0.0, %v1401
  %v1403 = vpop.f32.mrf.mxu0
  %v1404 = vadd.f32 0.0, %v1403
  %1405 = vmatmul.bf16.gmra.mxu0 %v1370
  %v1406 = vpop.f32.mrf.mxu0
  %v1407 = vadd.f32 0.0, %v1406
  %v1408 = vpop.f32.mrf.mxu0
  %v1409 = vadd.f32 0.0, %v1408
  %1410 = vdwg.mxu0
  %s1411 = scalar_lea.vmem %s5, 96
  %v1412 = vld [vmem:[%s1411] sm:$0xf]
  %v1413 = vld [vmem:[%s1411 + $0x4] sm:$0xf]
  %v1414 = vld [vmem:[%s1411 + $0x8] sm:$0xf]
  %v1415 = vld [vmem:[%s1411 + $0xc] sm:$0xf]
  %v1416 = vld [vmem:[%s1411 + $0x10] sm:$0xf]
  %v1417 = vld [vmem:[%s1411 + $0x14] sm:$0xf]
  %v1418 = vld [vmem:[%s1411 + $0x18] sm:$0xf]
  %v1419 = vld [vmem:[%s1411 + $0x1c] sm:$0xf]
  %v1420 = vld [vmem:[%s1411 + $0x20] sm:$0xf]
  %v1421 = vld [vmem:[%s1411 + $0x24] sm:$0xf]
  %v1422 = vld [vmem:[%s1411 + $0x28] sm:$0xf]
  %v1423 = vld [vmem:[%s1411 + $0x2c] sm:$0xf]
  %v1424 = vpack.c.bf16 %v1384, %v1382
  %v1425 = vpack.c.bf16 %v1389, %v1387
  %v1426 = vpack.c.bf16 %v1394, %v1392
  %v1427 = vpack.c.bf16 %v1399, %v1397
  %v1428 = vpack.c.bf16 %v1404, %v1402
  %v1429 = vpack.c.bf16 %v1409, %v1407
  %v1442 = vunpack.c.l.b16 %v1412
  %v1443 = vunpack.c.l.b16 %v1413
  %v1444 = vunpack.c.l.b16 %v1414
  %v1445 = vunpack.c.l.b16 %v1415
  %v1446 = vunpack.c.l.b16 %v1416
  %v1447 = vunpack.c.l.b16 %v1417
  %v1448 = vunpack.c.l.b16 %v1418
  %v1449 = vunpack.c.l.b16 %v1419
  %v1450 = vunpack.c.l.b16 %v1420
  %v1451 = vunpack.c.l.b16 %v1421
  %v1452 = vunpack.c.l.b16 %v1422
  %v1453 = vunpack.c.l.b16 %v1423
  %v1454 = vpack.c.b16 %v1443, %v1442
  %v1455 = vpack.c.b16 %v1445, %v1444
  %v1456 = vpack.c.b16 %v1447, %v1446
  %v1457 = vpack.c.b16 %v1449, %v1448
  %v1458 = vpack.c.b16 %v1451, %v1450
  %v1459 = vpack.c.b16 %v1453, %v1452
  %v1461 = vsel %vm175, %v1454, 0
  %v1464 = vsel %vm175, %v1455, 0
  %v1467 = vsel %vm175, %v1456, 0
  %v1470 = vsel %vm175, %v1457, 0
  %v1473 = vsel %vm175, %v1458, 0
  %v1476 = vsel %vm175, %v1459, 0
  %1478 = vmatpush.bf16.msra.mxu0 0
  %1479 = vmatpush.bf16.msra.mxu0 0
  %1480 = vmatpush.bf16.msra.mxu0 %v1429
  %1481 = vmatpush.bf16.msra.mxu0 %v1428
  %1482 = vmatpush.bf16.msra.mxu0 %v1427
  %1483 = vmatpush.bf16.msra.mxu0 %v1426
  %1484 = vmatpush.bf16.msra.mxu0 %v1425
  %1485 = vmatpush.bf16.msra.mxu0 %v1424
  %1486 = vmatmul.bf16.gmra.mxu0 %v1461
  %v1487 = vpop.f32.mrf.mxu0
  %v1488 = vadd.f32 0.0, %v1487
  %v1489 = vpop.f32.mrf.mxu0
  %v1490 = vadd.f32 0.0, %v1489
  %1491 = vmatmul.bf16.gmra.mxu0 %v1464
  %v1492 = vpop.f32.mrf.mxu0
  %v1493 = vadd.f32 0.0, %v1492
  %v1494 = vpop.f32.mrf.mxu0
  %v1495 = vadd.f32 0.0, %v1494
  %1496 = vmatmul.bf16.gmra.mxu0 %v1467
  %v1497 = vpop.f32.mrf.mxu0
  %v1498 = vadd.f32 0.0, %v1497
  %v1499 = vpop.f32.mrf.mxu0
  %v1500 = vadd.f32 0.0, %v1499
  %1501 = vmatmul.bf16.gmra.mxu0 %v1470
  %v1502 = vpop.f32.mrf.mxu0
  %v1503 = vadd.f32 0.0, %v1502
  %v1504 = vpop.f32.mrf.mxu0
  %v1505 = vadd.f32 0.0, %v1504
  %1506 = vmatmul.bf16.gmra.mxu0 %v1473
  %v1507 = vpop.f32.mrf.mxu0
  %v1508 = vadd.f32 0.0, %v1507
  %v1509 = vpop.f32.mrf.mxu0
  %v1510 = vadd.f32 0.0, %v1509
  %1511 = vmatmul.bf16.gmra.mxu0 %v1476
  %v1512 = vpop.f32.mrf.mxu0
  %v1513 = vadd.f32 0.0, %v1512
  %v1514 = vpop.f32.mrf.mxu0
  %v1515 = vadd.f32 0.0, %v1514
  %1516 = vdwg.mxu0
  %s1517 = scalar_lea.vmem %s6, 384
  %v1518 = vld [vmem:[%s1517] sm:$0xff]
  %v1519 = vld [vmem:[%s1517 + $0x8] sm:$0xff]
  %v1520 = vld [vmem:[%s1517 + $0x10] sm:$0xff]
  %v1521 = vld [vmem:[%s1517 + $0x18] sm:$0xff]
  %v1522 = vld [vmem:[%s1517 + $0x20] sm:$0xff]
  %v1523 = vld [vmem:[%s1517 + $0x28] sm:$0xff]
  %v1524 = vld [vmem:[%s1517 + $0x30] sm:$0xff]
  %v1525 = vld [vmem:[%s1517 + $0x38] sm:$0xff]
  %v1526 = vld [vmem:[%s1517 + $0x40] sm:$0xff]
  %v1527 = vld [vmem:[%s1517 + $0x48] sm:$0xff]
  %v1528 = vld [vmem:[%s1517 + $0x50] sm:$0xff]
  %v1529 = vld [vmem:[%s1517 + $0x58] sm:$0xff]
  %v1530 = vmul.f32 %v1488, %v1518
  %v1531 = vmul.f32 %v1490, %v1519
  %v1532 = vmul.f32 %v1493, %v1520
  %v1533 = vmul.f32 %v1495, %v1521
  %v1534 = vmul.f32 %v1498, %v1522
  %v1535 = vmul.f32 %v1500, %v1523
  %v1536 = vmul.f32 %v1503, %v1524
  %v1537 = vmul.f32 %v1505, %v1525
  %v1538 = vmul.f32 %v1508, %v1526
  %v1539 = vmul.f32 %v1510, %v1527
  %v1540 = vmul.f32 %v1513, %v1528
  %v1541 = vmul.f32 %v1515, %v1529
  %s1542 = scalar_lea.vmem %s6, 480
  %v1543 = vld [vmem:[%s1542] sm:$0xff]
  %v1544 = vld [vmem:[%s1542 + $0x8] sm:$0xff]
  %v1545 = vld [vmem:[%s1542 + $0x10] sm:$0xff]
  %v1546 = vld [vmem:[%s1542 + $0x18] sm:$0xff]
  %v1547 = vld [vmem:[%s1542 + $0x20] sm:$0xff]
  %v1548 = vld [vmem:[%s1542 + $0x28] sm:$0xff]
  %v1549 = vld [vmem:[%s1542 + $0x30] sm:$0xff]
  %v1550 = vld [vmem:[%s1542 + $0x38] sm:$0xff]
  %v1551 = vld [vmem:[%s1542 + $0x40] sm:$0xff]
  %v1552 = vld [vmem:[%s1542 + $0x48] sm:$0xff]
  %v1553 = vld [vmem:[%s1542 + $0x50] sm:$0xff]
  %v1554 = vld [vmem:[%s1542 + $0x58] sm:$0xff]
  %v1555 = vadd.f32 %v1530, %v1543
  %v1556 = vadd.f32 %v1531, %v1544
  %v1557 = vadd.f32 %v1532, %v1545
  %v1558 = vadd.f32 %v1533, %v1546
  %v1559 = vadd.f32 %v1534, %v1547
  %v1560 = vadd.f32 %v1535, %v1548
  %v1561 = vadd.f32 %v1536, %v1549
  %v1562 = vadd.f32 %v1537, %v1550
  %v1563 = vadd.f32 %v1538, %v1551
  %v1564 = vadd.f32 %v1539, %v1552
  %v1565 = vadd.f32 %v1540, %v1553
  %v1566 = vadd.f32 %v1541, %v1554
  %v1567 = vtanh.pop %v1555
  %v1568 = vtanh.pop %v1556
  %v1569 = vtanh.pop %v1557
  %v1570 = vtanh.pop %v1558
  %v1571 = vtanh.pop %v1559
  %v1572 = vtanh.pop %v1560
  %v1573 = vtanh.pop %v1561
  %v1574 = vtanh.pop %v1562
  %v1575 = vtanh.pop %v1563
  %v1576 = vtanh.pop %v1564
  %v1577 = vtanh.pop %v1565
  %v1578 = vtanh.pop %v1566
  %v1579 = vadd.f32 %v1567, %v1072
  %v1580 = vadd.f32 %v1568, %v1073
  %v1581 = vadd.f32 %v1569, %v1074
  %v1582 = vadd.f32 %v1570, %v1075
  %v1583 = vadd.f32 %v1571, %v1076
  %v1584 = vadd.f32 %v1572, %v1077
  %v1585 = vadd.f32 %v1573, %v1078
  %v1586 = vadd.f32 %v1574, %v1079
  %v1587 = vadd.f32 %v1575, %v1080
  %v1588 = vadd.f32 %v1576, %v1081
  %v1589 = vadd.f32 %v1577, %v1082
  %v1590 = vadd.f32 %v1578, %v1083
  %v1591 = vpack.c.bf16 %v1580, %v1579
  %v1592 = vpack.c.bf16 %v1582, %v1581
  %v1593 = vpack.c.bf16 %v1584, %v1583
  %v1594 = vpack.c.bf16 %v1586, %v1585
  %v1595 = vpack.c.bf16 %v1588, %v1587
  %v1596 = vpack.c.bf16 %v1590, %v1589
  %v1597 = vld [vmem:[%s8] sm:$0xf]
  %v1598 = vld [vmem:[%s8 + $0x4] sm:$0xf]
  %v1599 = vld [vmem:[%s8 + $0x8] sm:$0xf]
  %v1600 = vld [vmem:[%s8 + $0xc] sm:$0xf]
  %v1605 = vunpack.c.l.b16 %v1597
  %v1606 = vunpack.c.l.b16 %v1598
  %v1607 = vunpack.c.l.b16 %v1599
  %v1608 = vunpack.c.l.b16 %v1600
  %v1609 = vpack.c.b16 %v1606, %v1605
  %v1610 = vpack.c.b16 %v1608, %v1607
  %v1614 = vsel %vm860, %v1591, 0
  %v1617 = vsel %vm860, %v1592, 0
  %v1620 = vsel %vm860, %v1593, 0
  %v1623 = vsel %vm860, %v1594, 0
  %v1626 = vsel %vm860, %v1595, 0
  %v1629 = vsel %vm860, %v1596, 0
  %1631 = vmatpush.bf16.msra.mxu0 0
  %1632 = vmatpush.bf16.msra.mxu0 0
  %1633 = vmatpush.bf16.msra.mxu0 0
  %1634 = vmatpush.bf16.msra.mxu0 0
  %1635 = vmatpush.bf16.msra.mxu0 0
  %1636 = vmatpush.bf16.msra.mxu0 0
  %1637 = vmatpush.bf16.msra.mxu0 %v1610
  %1638 = vmatpush.bf16.msra.mxu0 %v1609
  %1639 = vmatmul.bf16.gmra.mxu0 %v1614
  %v1640 = vpop.f32.mrf.mxu0
  %v1641 = vadd.f32 0.0, %v1640
  %v1642 = vpop.f32.mrf.mxu0
  %v1643 = vadd.f32 0.0, %v1642
  %1644 = vmatmul.bf16.gmra.mxu0 %v1617
  %v1645 = vpop.f32.mrf.mxu0
  %v1646 = vadd.f32 0.0, %v1645
  %v1647 = vpop.f32.mrf.mxu0
  %v1648 = vadd.f32 0.0, %v1647
  %1649 = vmatmul.bf16.gmra.mxu0 %v1620
  %v1650 = vpop.f32.mrf.mxu0
  %v1651 = vadd.f32 0.0, %v1650
  %v1652 = vpop.f32.mrf.mxu0
  %v1653 = vadd.f32 0.0, %v1652
  %1654 = vmatmul.bf16.gmra.mxu0 %v1623
  %v1655 = vpop.f32.mrf.mxu0
  %v1656 = vadd.f32 0.0, %v1655
  %v1657 = vpop.f32.mrf.mxu0
  %v1658 = vadd.f32 0.0, %v1657
  %1659 = vmatmul.bf16.gmra.mxu0 %v1626
  %v1660 = vpop.f32.mrf.mxu0
  %v1661 = vadd.f32 0.0, %v1660
  %v1662 = vpop.f32.mrf.mxu0
  %v1663 = vadd.f32 0.0, %v1662
  %1664 = vmatmul.bf16.gmra.mxu0 %v1629
  %v1665 = vpop.f32.mrf.mxu0
  %v1666 = vadd.f32 0.0, %v1665
  %v1667 = vpop.f32.mrf.mxu0
  %v1668 = vadd.f32 0.0, %v1667
  %1669 = vdwg.mxu0
  %s1670 = scalar_lea.vmem %s5, 144
  %v1671 = vld [vmem:[%s1670] sm:$0xf]
  %v1672 = vld [vmem:[%s1670 + $0x4] sm:$0xf]
  %v1673 = vld [vmem:[%s1670 + $0x8] sm:$0xf]
  %v1674 = vld [vmem:[%s1670 + $0xc] sm:$0xf]
  %v1675 = vld [vmem:[%s1670 + $0x10] sm:$0xf]
  %v1676 = vld [vmem:[%s1670 + $0x14] sm:$0xf]
  %v1677 = vld [vmem:[%s1670 + $0x18] sm:$0xf]
  %v1678 = vld [vmem:[%s1670 + $0x1c] sm:$0xf]
  %v1679 = vld [vmem:[%s1670 + $0x20] sm:$0xf]
  %v1680 = vld [vmem:[%s1670 + $0x24] sm:$0xf]
  %v1681 = vld [vmem:[%s1670 + $0x28] sm:$0xf]
  %v1682 = vld [vmem:[%s1670 + $0x2c] sm:$0xf]
  %v1683 = vpack.c.bf16 %v1643, %v1641
  %v1684 = vpack.c.bf16 %v1648, %v1646
  %v1685 = vpack.c.bf16 %v1653, %v1651
  %v1686 = vpack.c.bf16 %v1658, %v1656
  %v1687 = vpack.c.bf16 %v1663, %v1661
  %v1688 = vpack.c.bf16 %v1668, %v1666
  %v1689 = vld [vmem:[%s9] sm:$0x1]
  %v1691 = vperm.slane %v1689, 0
  %v1705 = vunpack.c.l.b16 %v1671
  %v1706 = vunpack.c.l.b16 %v1672
  %v1707 = vunpack.c.l.b16 %v1673
  %v1708 = vunpack.c.l.b16 %v1674
  %v1709 = vunpack.c.l.b16 %v1675
  %v1710 = vunpack.c.l.b16 %v1676
  %v1711 = vunpack.c.l.b16 %v1677
  %v1712 = vunpack.c.l.b16 %v1678
  %v1713 = vunpack.c.l.b16 %v1679
  %v1714 = vunpack.c.l.b16 %v1680
  %v1715 = vunpack.c.l.b16 %v1681
  %v1716 = vunpack.c.l.b16 %v1682
  %v1717 = vpack.c.b16 %v1706, %v1705
  %v1718 = vpack.c.b16 %v1708, %v1707
  %v1719 = vpack.c.b16 %v1710, %v1709
  %v1720 = vpack.c.b16 %v1712, %v1711
  %v1721 = vpack.c.b16 %v1714, %v1713
  %v1722 = vpack.c.b16 %v1716, %v1715
  %v1724 = vsel %vm175, %v1717, 0
  %v1727 = vsel %vm175, %v1718, 0
  %v1730 = vsel %vm175, %v1719, 0
  %v1733 = vsel %vm175, %v1720, 0
  %v1736 = vsel %vm175, %v1721, 0
  %v1739 = vsel %vm175, %v1722, 0
  %1741 = vmatpush.bf16.msra.mxu0 0
  %1742 = vmatpush.bf16.msra.mxu0 0
  %1743 = vmatpush.bf16.msra.mxu0 %v1688
  %1744 = vmatpush.bf16.msra.mxu0 %v1687
  %1745 = vmatpush.bf16.msra.mxu0 %v1686
  %1746 = vmatpush.bf16.msra.mxu0 %v1685
  %1747 = vmatpush.bf16.msra.mxu0 %v1684
  %1748 = vmatpush.bf16.msra.mxu0 %v1683
  %1749 = vmatmul.bf16.gmra.mxu0 %v1724
  %v1750 = vpop.f32.mrf.mxu0
  %v1751 = vadd.f32 %v1691, %v1750
  %v1752 = vpop.f32.mrf.mxu0
  %v1753 = vadd.f32 %v1691, %v1752
  %1754 = vmatmul.bf16.gmra.mxu0 %v1727
  %v1755 = vpop.f32.mrf.mxu0
  %v1756 = vadd.f32 %v1691, %v1755
  %v1757 = vpop.f32.mrf.mxu0
  %v1758 = vadd.f32 %v1691, %v1757
  %1759 = vmatmul.bf16.gmra.mxu0 %v1730
  %v1760 = vpop.f32.mrf.mxu0
  %v1761 = vadd.f32 %v1691, %v1760
  %v1762 = vpop.f32.mrf.mxu0
  %v1763 = vadd.f32 %v1691, %v1762
  %1764 = vmatmul.bf16.gmra.mxu0 %v1733
  %v1765 = vpop.f32.mrf.mxu0
  %v1766 = vadd.f32 %v1691, %v1765
  %v1767 = vpop.f32.mrf.mxu0
  %v1768 = vadd.f32 %v1691, %v1767
  %1769 = vmatmul.bf16.gmra.mxu0 %v1736
  %v1770 = vpop.f32.mrf.mxu0
  %v1771 = vadd.f32 %v1691, %v1770
  %v1772 = vpop.f32.mrf.mxu0
  %v1773 = vadd.f32 %v1691, %v1772
  %1774 = vmatmul.bf16.gmra.mxu0 %v1739
  %v1775 = vpop.f32.mrf.mxu0
  %v1776 = vadd.f32 %v1691, %v1775
  %v1777 = vpop.f32.mrf.mxu0
  %v1778 = vadd.f32 %v1691, %v1777
  %1779 = vdwg.mxu0
  %v1780 = vadd.f32 %v1751, %v36
  %v1781 = vadd.f32 %v1753, %v37
  %v1782 = vadd.f32 %v1756, %v38
  %v1783 = vadd.f32 %v1758, %v39
  %v1784 = vadd.f32 %v1761, %v40
  %v1785 = vadd.f32 %v1763, %v41
  %v1786 = vadd.f32 %v1766, %v42
  %v1787 = vadd.f32 %v1768, %v43
  %v1788 = vadd.f32 %v1771, %v44
  %v1789 = vadd.f32 %v1773, %v45
  %v1790 = vadd.f32 %v1776, %v46
  %v1791 = vadd.f32 %v1778, %v47
  %1792 = vst.msk [vmem:[%s10] sm:$0xff] %vm825, %v1780
  %1793 = vst.msk [vmem:[%s10 + $0x8] sm:$0xff] %vm825, %v1781
  %1794 = vst.msk [vmem:[%s10 + $0x10] sm:$0xff] %vm825, %v1782
  %1795 = vst.msk [vmem:[%s10 + $0x18] sm:$0xff] %vm825, %v1783
  %1796 = vst.msk [vmem:[%s10 + $0x20] sm:$0xff] %vm825, %v1784
  %1797 = vst.msk [vmem:[%s10 + $0x28] sm:$0xff] %vm825, %v1785
  %1798 = vst.msk [vmem:[%s10 + $0x30] sm:$0xff] %vm825, %v1786
  %1799 = vst.msk [vmem:[%s10 + $0x38] sm:$0xff] %vm825, %v1787
  %1800 = vst.msk [vmem:[%s10 + $0x40] sm:$0xff] %vm825, %v1788
  %1801 = vst.msk [vmem:[%s10 + $0x48] sm:$0xff] %vm825, %v1789
  %1802 = vst.msk [vmem:[%s10 + $0x50] sm:$0xff] %vm825, %v1790
  %1803 = vst.msk [vmem:[%s10 + $0x58] sm:$0xff] %vm825, %v1791
  // Predicated region
  $region42: #{st_conv_forward.1} parent=0 // pred_check
    _
  $region43: #{st_conv_forward.1} parent=0 // pred_check_branch
    %1805 = sbr.rel (0) target = $region45
  $region44: #{st_conv_forward.1} parent=0 // pred_region
    _
  $region45: #{st_conv_forward.1} parent=0 // pred_fallthru
    _
  // Predicated region
  $region46: #{st_conv_forward.1} parent=0 // pred_check
    _
  $region47: #{st_conv_forward.1} parent=0 // pred_check_branch
    %1807 = sbr.rel (0) target = $region49
  $region48: #{st_conv_forward.1} parent=0 // pred_region
    _
  $region49: #{st_conv_forward.1} parent=0 // pred_fallthru
    _

</llo_original>
